<compile_context>
chip_gen: v5e
topology: v5e:2x2
jax: 0.10.0
libtpu: 0.0.40
codegen_flags: <defaults>
</compile_context>

<pallas_src>
import jax
import jax.numpy as jnp
from jax.experimental import pallas as pl
from jax.experimental.pallas import tpu as pltpu

LANES = 128
_EPS = 1e-6
_HALF_PI = 1.5707963267948966

# ---- fused input slab: component-major rows, lanes = edge / node / step index.
#      Every group starts on an 8-sublane boundary.
IN_ROWS = 64
_R_POSES = 0     # 7 rows (lanes = edge index)
_R_NODE1 = 8     # 7 rows (lanes = edge index)
_R_NODE2 = 16    # 7 rows (lanes = edge index)
_R_NODES = 24    # 7 rows (lanes = node index)
_R_VELS = 32     # 3 rows (lanes = node index)
_R_DROT = 40     # 4 rows (lanes = step index)
_R_DVEL = 48     # 3 rows
_R_DTRANS = 56   # 3 rows
_R_DTS = 59      # 1 row

# ---- fused output slab: three full-vreg (8,128) groups, written as they finish.
OUT_ROWS = 24
_O_PGERR = 0      # rows 0..5   pgerr [tau, phi]   (lanes = edge index)
_O_ADJVEL = 8     # rows 8..10  adjvelerr          (lanes = step index)
_O_IMUROT = 11    # rows 11..13 imuroterr
_O_TRANSVEL = 16  # rows 16..18 transvelerr


# ------------------------------------------------------------------------------------
# Quaternion / SE(3) math shared by the kernel and the pure-JAX reference.
# Works on tuples of same-shaped arrays: (1,128) lane-rows inside the kernel,
# (n,) columns in the reference.
# ------------------------------------------------------------------------------------


def quat_conj(q):
    x, y, z, w = q
    return (-x, -y, -z, w)


def quat_mul(q1, q2):
    x1, y1, z1, w1 = q1
    x2, y2, z2, w2 = q2
    x = w1 * x2 + x1 * w2 + y1 * z2 - z1 * y2
    y = w1 * y2 - x1 * z2 + y1 * w2 + z1 * x2
    z = w1 * z2 + x1 * y2 - y1 * x2 + z1 * w2
    w = w1 * w2 - x1 * x2 - y1 * y2 - z1 * z2
    return (x, y, z, w)


def quat_rotate(q, v):
    # v' = v + 2*w*(u x v) + 2*u x (u x v),  u = (x, y, z)
    x, y, z, w = q
    vx, vy, vz = v
    tx = 2.0 * (y * vz - z * vy)
    ty = 2.0 * (z * vx - x * vz)
    tz = 2.0 * (x * vy - y * vx)
    rx = vx + w * tx + (y * tz - z * ty)
    ry = vy + w * ty + (z * tx - x * tz)
    rz = vz + w * tz + (x * ty - y * tx)
    return (rx, ry, rz)


def cross3(a, b):
    ax, ay, az = a
    bx, by, bz = b
    return (ay * bz - az * by, az * bx - ax * bz, ax * by - ay * bx)


def se3_inv(t, q):
    qi = quat_conj(q)
    ti = quat_rotate(qi, t)
    return tuple(-c for c in ti), qi


def se3_mul(t1, q1, t2, q2):
    rt2 = quat_rotate(q1, t2)
    t = tuple(a + b for a, b in zip(t1, rt2))
    return t, quat_mul(q1, q2)


def _atan(x):
    """arctan built only from abs/mul/div/sqrt/select (safe Mosaic lowering, no math.atan).

    Range-reduce |x| to [0,1], halve the angle twice via atan(t) = 2*atan(t/(1+sqrt(1+t^2))),
    then a 9th-order odd Taylor series. |error| < 1e-7 over the whole real line.
    """
    ax = jnp.abs(x)
    inv = ax > 1.0
    t = jnp.where(inv, 1.0 / jnp.maximum(ax, 1.0), ax)
    t = t / (1.0 + jnp.sqrt(1.0 + t * t))
    t = t / (1.0 + jnp.sqrt(1.0 + t * t))
    t2 = t * t
    p = t * (1.0 + t2 * (-1.0 / 3.0 + t2 * (0.2 + t2 * (-1.0 / 7.0 + t2 * (1.0 / 9.0)))))
    p = 4.0 * p
    p = jnp.where(inv, _HALF_PI - p, p)
    return jnp.where(x < 0.0, -p, p)


def so3_log(q, atan=jnp.arctan):
    # pypose-style SO3 log: factor * (x, y, z)
    x, y, z, w = q
    vn2 = x * x + y * y + z * z
    vn = jnp.sqrt(vn2)
    safe_vn = jnp.where(vn > _EPS, vn, 1.0)
    safe_w = jnp.where(jnp.abs(w) > _EPS, w, 1.0)
    atan_factor = 2.0 * atan(vn / safe_w) / safe_vn
    sign_w = jnp.where(w >= 0.0, 1.0, -1.0)     # explicit select: sign(0) edge case -> +1
    pi_factor = sign_w * jnp.pi / safe_vn
    taylor = 2.0 / safe_w - (2.0 / 3.0) * vn2 / (safe_w * safe_w * safe_w)
    factor = jnp.where(
        vn > _EPS,
        jnp.where(jnp.abs(w) > _EPS, atan_factor, pi_factor),
        taylor,
    )
    return (factor * x, factor * y, factor * z)


def _jlinv_coef_ref(theta):
    safe = jnp.where(theta > _EPS, theta, 1.0)
    big = (1.0 - safe * jnp.cos(0.5 * safe) / (2.0 * jnp.sin(0.5 * safe))) / (safe * safe)
    return jnp.where(theta > _EPS, big, 1.0 / 12.0)


def se3_log_ref(t, q):
    """Reference SE(3) log (uses jnp trig; only called outside the kernel)."""
    phi = so3_log(q)
    theta = jnp.sqrt(phi[0] * phi[0] + phi[1] * phi[1] + phi[2] * phi[2])
    coef2 = _jlinv_coef_ref(theta)
    pxt = cross3(phi, t)
    pxpxt = cross3(phi, pxt)
    tau = tuple(ti - 0.5 * a + coef2 * b for ti, a, b in zip(t, pxt, pxpxt))
    return tau, phi


def se3_log_kernel(t, q):
    """Kernel SE(3) log: same math as se3_log_ref, but trig-free.

    theta = 2*|atan(|v|/w)|, so cot(theta/2) = |w|/|v| exactly -- no in-kernel sin/cos,
    and arctan uses the polynomial _atan above.
    """
    x, y, z, w = q
    phi = so3_log(q, atan=_atan)
    theta = jnp.sqrt(phi[0] * phi[0] + phi[1] * phi[1] + phi[2] * phi[2])
    vn = jnp.sqrt(x * x + y * y + z * z)
    cot_half = jnp.abs(w) / jnp.where(vn > _EPS, vn, 1.0)
    safe_t = jnp.where(theta > _EPS, theta, 1.0)
    coef2 = jnp.where(theta > _EPS,
                      (1.0 - 0.5 * safe_t * cot_half) / (safe_t * safe_t),
                      1.0 / 12.0)
    pxt = cross3(phi, t)
    pxpxt = cross3(phi, pxt)
    tau = tuple(ti - 0.5 * a + coef2 * b for ti, a, b in zip(t, pxt, pxpxt))
    return tau, phi


# ------------------------------------------------------------------------------------
# Fused Pallas kernel: one launch, one VMEM input slab, three streaming (8,128) stores.
# ------------------------------------------------------------------------------------


def _fused_kernel(in_ref, out_ref):
    def row(i):
        return in_ref[i:i + 1, :]

    def rows(base, n):
        return tuple(row(base + j) for j in range(n))

    zrow = jnp.zeros((1, LANES), jnp.float32)

    # ---- group A: pgerr = Log(poses^-1 o node1^-1 o node2) -------------------------
    tp, qp = rows(_R_POSES, 3), rows(_R_POSES + 3, 4)
    t1, q1 = rows(_R_NODE1, 3), rows(_R_NODE1 + 3, 4)
    t2, q2 = rows(_R_NODE2, 3), rows(_R_NODE2 + 3, 4)
    tpi, qpi = se3_inv(tp, qp)
    t1i, q1i = se3_inv(t1, q1)
    ta, qa = se3_mul(tpi, qpi, t1i, q1i)
    te, qe = se3_mul(ta, qa, t2, q2)
    tau, phi = se3_log_kernel(te, qe)
    # Stream out as one unmasked (8,128) store; group-A inputs die here.
    out_ref[0:8, :] = jnp.concatenate(list(tau) + list(phi) + [zrow, zrow], axis=0)

    # ---- groups B/C share the nodes+vels block and its lane-rolled "[1:]" view -----
    nv = in_ref[_R_NODES:_R_NODES + 16, :]       # nodes(7) pad(1) vels(3) pad(5)
    # ONE whole-block XLU lane rotate (axis=1: pltpu.roll needs a non-negative axis).
    # nxt[:, i] = nv[:, i+1]; lane 127 wraps to lane 0 -- safe only because the wrapper
    # slices outputs to :n-1 and asserts n <= 128 (see the E,N>128 TODO above).
    nxt = pltpu.roll(nv, shift=LANES - 1, axis=1)

    ntr = tuple(nv[j:j + 1, :] for j in range(0, 3))
    nq = tuple(nv[j:j + 1, :] for j in range(3, 7))
    vel = tuple(nv[j:j + 1, :] for j in range(8, 11))
    ntr2 = tuple(nxt[j:j + 1, :] for j in range(0, 3))
    nq2 = tuple(nxt[j:j + 1, :] for j in range(3, 7))
    vel2 = tuple(nxt[j:j + 1, :] for j in range(8, 11))

    drot = rows(_R_DROT, 4)
    dvel = rows(_R_DVEL, 3)
    dtrans = rows(_R_DTRANS, 3)
    dts = row(_R_DTS)

    # ---- group B: adjvelerr = imu_dvels - diff(vels);
    #               imuroterr = Log(drot^-1 o R(nodes[:-1])^-1 o R(nodes[1:])) --------
    adjvel = tuple(dv - (b - a) for dv, a, b in zip(dvel, vel, vel2))
    qerr = quat_mul(quat_mul(quat_conj(drot), quat_conj(nq)), nq2)
    imurot = so3_log(qerr, atan=_atan)
    out_ref[8:16, :] = jnp.concatenate(list(adjvel) + list(imurot) + [zrow, zrow], axis=0)

    # ---- group C: transvelerr = diff(trans(nodes)) - (vels[:-1]*dts + imu_dtrans) ---
    transvel = tuple((b - a) - (va * dts + dt)
                     for a, b, va, dt in zip(ntr, ntr2, vel, dtrans))
    out_ref[16:24, :] = jnp.concatenate(list(transvel) + [zrow] * 5, axis=0)


# ------------------------------------------------------------------------------------
# Wrapper: gather + single fused pack + one grid-free pallas_call + unpack, under jax.jit.
# ------------------------------------------------------------------------------------


@jax.jit
def pose_vel_graph_forward(nodes, vels, edges, poses, imu_drots, imu_dtrans, imu_dvels, dts):
    """Equivalent of PoseVelGraph.forward with reproj=None."""
    e = poses.shape[0]
    n = nodes.shape[0]
    assert e <= LANES and n <= LANES, "single-tile kernel assumes E, N <= 128"

    node1 = nodes[edges[:, 0]]
    node2 = nodes[edges[:, 1]]

    f32 = jnp.float32
    # Single fused pack: one zeros + 9 static-slice updates + one small transpose.
    rm = jnp.zeros((LANES, IN_ROWS), f32)
    rm = rm.at[:e, _R_POSES:_R_POSES + 7].set(poses.astype(f32))
    rm = rm.at[:e, _R_NODE1:_R_NODE1 + 7].set(node1.astype(f32))
    rm = rm.at[:e, _R_NODE2:_R_NODE2 + 7].set(node2.astype(f32))
    rm = rm.at[:n, _R_NODES:_R_NODES + 7].set(nodes.astype(f32))
    rm = rm.at[:n, _R_VELS:_R_VELS + 3].set(vels.astype(f32))
    rm = rm.at[:n - 1, _R_DROT:_R_DROT + 4].set(imu_drots.astype(f32))
    rm = rm.at[:n - 1, _R_DVEL:_R_DVEL + 3].set(imu_dvels.astype(f32))
    rm = rm.at[:n - 1, _R_DTRANS:_R_DTRANS + 3].set(imu_dtrans.astype(f32))
    rm = rm.at[:n - 1, _R_DTS:_R_DTS + 1].set(dts.astype(f32))
    slab = rm.T                                    # (IN_ROWS, LANES), component-major

    out = pl.pallas_call(
        _fused_kernel,
        out_shape=jax.ShapeDtypeStruct((OUT_ROWS, LANES), jnp.float32),
        # Grid-free: whole arrays resident in VMEM -> no 1-step auto-pipeline machinery.
        in_specs=[pl.BlockSpec(memory_space=pltpu.MemorySpace.VMEM)],
        out_specs=pl.BlockSpec(memory_space=pltpu.MemorySpace.VMEM),
        # Advisory: this custom call is microsecond-cheap; keep surrounding fusions tight.
        cost_estimate=pl.CostEstimate(
            flops=5_000, transcendentals=1_024,
            bytes_accessed=(IN_ROWS + OUT_ROWS) * LANES * 4),
    )(slab)

    pgerr = out[_O_PGERR:_O_PGERR + 6, :e].T               # (E, 6)   [tau, phi]
    adjvelerr = out[_O_ADJVEL:_O_ADJVEL + 3, :n - 1].T     # (N-1, 3)
    imuroterr = out[_O_IMUROT:_O_IMUROT + 3, :n - 1].T     # (N-1, 3)
    transvelerr = out[_O_TRANSVEL:_O_TRANSVEL + 3, :n - 1].T
    return pgerr, adjvelerr, imuroterr, transvelerr


# ------------------------------------------------------------------------------------
# Pure-JAX reference (row-major, jnp trig, exact arctan) for checking the kernel plumbing.
# ------------------------------------------------------------------------------------


def _cols(a):
    return tuple(a[:, i] for i in range(a.shape[1]))


def _ref_forward(nodes, vels, edges, poses, imu_drots, imu_dtrans, imu_dvels, dts):
    n1 = nodes[edges[:, 0]]
    n2 = nodes[edges[:, 1]]

    def split(se3):
        return _cols(se3[:, :3]), _cols(se3[:, 3:])

    tp, qp = split(poses)
    t1, q1 = split(n1)
    t2, q2 = split(n2)
    tpi, qpi = se3_inv(tp, qp)
    t1i, q1i = se3_inv(t1, q1)
    ta, qa = se3_mul(tpi, qpi, t1i, q1i)
    te, qe = se3_mul(ta, qa, t2, q2)
    tau, phi = se3_log_ref(te, qe)
    pgerr = jnp.stack(tau + phi, axis=-1)

    adjvelerr = imu_dvels - (vels[1:] - vels[:-1])

    r1 = _cols(nodes[:-1, 3:7])
    r2 = _cols(nodes[1:, 3:7])
    dr = _cols(imu_drots)
    qerr = quat_mul(quat_mul(quat_conj(dr), quat_conj(r1)), r2)
    imuroterr = jnp.stack(so3_log(qerr), axis=-1)

    transvelerr = (nodes[1:, :3] - nodes[:-1, :3]) - (vels[:-1] * dts + imu_dtrans)
    return pgerr, adjvelerr, imuroterr, transvelerr


# ------------------------------------------------------------------------------------

if __name__ == "__main__":
    N = 9          # nodes
    E = 8          # pose-graph edges
    key = jax.random.PRNGKey(0)
    ks = jax.random.split(key, 8)

    def rand_quat(k, n):
        q = jax.random.normal(k, (n, 4), jnp.float32)
        return q / jnp.linalg.norm(q, axis=-1, keepdims=True)

    # Deterministic "parameters" (pp.Parameter nodes, nn.Parameter vels) built in-script.
    nodes = jnp.concatenate(
        [0.5 * jax.random.normal(ks[0], (N, 3), jnp.float32), rand_quat(ks[1], N)], axis=-1)
    vels = jax.random.normal(ks[2], (N, 3), jnp.float32)

    edges = jnp.stack(
        [jnp.arange(E, dtype=jnp.int32), jnp.arange(1, E + 1, dtype=jnp.int32)], axis=-1)
    poses = jnp.concatenate(
        [0.1 * jax.random.normal(ks[3], (E, 3), jnp.float32), rand_quat(ks[4], E)], axis=-1)
    imu_drots = rand_quat(ks[5], N - 1)
    imu_dtrans = 0.1 * jax.random.normal(ks[6], (N - 1, 3), jnp.float32)
    imu_dvels = 0.1 * jax.random.normal(ks[7], (N - 1, 3), jnp.float32)
    dts = jnp.full((N - 1, 1), 0.1, jnp.float32)

    outs = pose_vel_graph_forward(nodes, vels, edges, poses, imu_drots, imu_dtrans,
                                  imu_dvels, dts)
    outs = jax.block_until_ready(outs)

    refs = _ref_forward(nodes, vels, edges, poses, imu_drots, imu_dtrans, imu_dvels, dts)
    names = ["pgerr", "adjvelerr", "imuroterr", "transvelerr"]
    expected_shapes = [(E, 6), (N - 1, 3), (N - 1, 3), (N - 1, 3)]
    # Exact divisions in-kernel now; remaining delta vs the reference is the ~1e-7 polynomial
    # arctan and f32 op-order differences.
    for name, o, r, s in zip(names, outs, refs, expected_shapes):
        assert o.shape == s, f"{name} shape {o.shape} != {s}"
        assert jnp.allclose(o, r, atol=1e-4, rtol=1e-4), f"{name} mismatch"

    print("KERNEL_OK")
</pallas_src>

<mosaic_0001>
module attributes {stable_mosaic.version = 11 : i64} {
  func.func @_fused_kernel(%arg0: memref<64x128xf32, #tpu.memory_space<vmem>>, %arg1: memref<24x128xf32, #tpu.memory_space<vmem>>) attributes {dimension_semantics = [], scalar_prefetch = 0 : i64, scratch_operands = 0 : i64, tpu.core_type = #tpu.core_type<tc>} {
    %cst = arith.constant 0.000000e+00 : f32
    %0 = vector.broadcast %cst : f32 to vector<1x128xf32>
    %c0 = arith.constant 0 : index
    %c0_0 = arith.constant 0 : index
    %1 = vector.load %arg0[%c0, %c0_0] : memref<64x128xf32, #tpu.memory_space<vmem>>, vector<1x128xf32>
    %c1 = arith.constant 1 : index
    %c0_1 = arith.constant 0 : index
    %2 = vector.load %arg0[%c1, %c0_1] : memref<64x128xf32, #tpu.memory_space<vmem>>, vector<1x128xf32>
    %c2 = arith.constant 2 : index
    %c0_2 = arith.constant 0 : index
    %3 = vector.load %arg0[%c2, %c0_2] : memref<64x128xf32, #tpu.memory_space<vmem>>, vector<1x128xf32>
    %c3 = arith.constant 3 : index
    %c0_3 = arith.constant 0 : index
    %4 = vector.load %arg0[%c3, %c0_3] : memref<64x128xf32, #tpu.memory_space<vmem>>, vector<1x128xf32>
    %c4 = arith.constant 4 : index
    %c0_4 = arith.constant 0 : index
    %5 = vector.load %arg0[%c4, %c0_4] : memref<64x128xf32, #tpu.memory_space<vmem>>, vector<1x128xf32>
    %c5 = arith.constant 5 : index
    %c0_5 = arith.constant 0 : index
    %6 = vector.load %arg0[%c5, %c0_5] : memref<64x128xf32, #tpu.memory_space<vmem>>, vector<1x128xf32>
    %c6 = arith.constant 6 : index
    %c0_6 = arith.constant 0 : index
    %7 = vector.load %arg0[%c6, %c0_6] : memref<64x128xf32, #tpu.memory_space<vmem>>, vector<1x128xf32>
    %c8 = arith.constant 8 : index
    %c0_7 = arith.constant 0 : index
    %8 = vector.load %arg0[%c8, %c0_7] : memref<64x128xf32, #tpu.memory_space<vmem>>, vector<1x128xf32>
    %c9 = arith.constant 9 : index
    %c0_8 = arith.constant 0 : index
    %9 = vector.load %arg0[%c9, %c0_8] : memref<64x128xf32, #tpu.memory_space<vmem>>, vector<1x128xf32>
    %c10 = arith.constant 10 : index
    %c0_9 = arith.constant 0 : index
    %10 = vector.load %arg0[%c10, %c0_9] : memref<64x128xf32, #tpu.memory_space<vmem>>, vector<1x128xf32>
    %c11 = arith.constant 11 : index
    %c0_10 = arith.constant 0 : index
    %11 = vector.load %arg0[%c11, %c0_10] : memref<64x128xf32, #tpu.memory_space<vmem>>, vector<1x128xf32>
    %c12 = arith.constant 12 : index
    %c0_11 = arith.constant 0 : index
    %12 = vector.load %arg0[%c12, %c0_11] : memref<64x128xf32, #tpu.memory_space<vmem>>, vector<1x128xf32>
    %c13 = arith.constant 13 : index
    %c0_12 = arith.constant 0 : index
    %13 = vector.load %arg0[%c13, %c0_12] : memref<64x128xf32, #tpu.memory_space<vmem>>, vector<1x128xf32>
    %c14 = arith.constant 14 : index
    %c0_13 = arith.constant 0 : index
    %14 = vector.load %arg0[%c14, %c0_13] : memref<64x128xf32, #tpu.memory_space<vmem>>, vector<1x128xf32>
    %c16 = arith.constant 16 : index
    %c0_14 = arith.constant 0 : index
    %15 = vector.load %arg0[%c16, %c0_14] : memref<64x128xf32, #tpu.memory_space<vmem>>, vector<1x128xf32>
    %c17 = arith.constant 17 : index
    %c0_15 = arith.constant 0 : index
    %16 = vector.load %arg0[%c17, %c0_15] : memref<64x128xf32, #tpu.memory_space<vmem>>, vector<1x128xf32>
    %c18 = arith.constant 18 : index
    %c0_16 = arith.constant 0 : index
    %17 = vector.load %arg0[%c18, %c0_16] : memref<64x128xf32, #tpu.memory_space<vmem>>, vector<1x128xf32>
    %c19 = arith.constant 19 : index
    %c0_17 = arith.constant 0 : index
    %18 = vector.load %arg0[%c19, %c0_17] : memref<64x128xf32, #tpu.memory_space<vmem>>, vector<1x128xf32>
    %c20 = arith.constant 20 : index
    %c0_18 = arith.constant 0 : index
    %19 = vector.load %arg0[%c20, %c0_18] : memref<64x128xf32, #tpu.memory_space<vmem>>, vector<1x128xf32>
    %c21 = arith.constant 21 : index
    %c0_19 = arith.constant 0 : index
    %20 = vector.load %arg0[%c21, %c0_19] : memref<64x128xf32, #tpu.memory_space<vmem>>, vector<1x128xf32>
    %c22 = arith.constant 22 : index
    %c0_20 = arith.constant 0 : index
    %21 = vector.load %arg0[%c22, %c0_20] : memref<64x128xf32, #tpu.memory_space<vmem>>, vector<1x128xf32>
    %cst_21 = arith.constant 0.000000e+00 : f32
    %22 = vector.broadcast %cst_21 : f32 to vector<1x128xf32>
    %23 = arith.subf %22, %4 : vector<1x128xf32>
    %cst_22 = arith.constant 0.000000e+00 : f32
    %24 = vector.broadcast %cst_22 : f32 to vector<1x128xf32>
    %25 = arith.subf %24, %5 : vector<1x128xf32>
    %cst_23 = arith.constant 0.000000e+00 : f32
    %26 = vector.broadcast %cst_23 : f32 to vector<1x128xf32>
    %27 = arith.subf %26, %6 : vector<1x128xf32>
    %28 = arith.mulf %25, %3 : vector<1x128xf32>
    %29 = arith.mulf %27, %2 : vector<1x128xf32>
    %30 = arith.subf %28, %29 : vector<1x128xf32>
    %cst_24 = arith.constant 2.000000e+00 : f32
    %31 = vector.broadcast %cst_24 : f32 to vector<1x128xf32>
    %32 = arith.mulf %31, %30 : vector<1x128xf32>
    %33 = arith.mulf %27, %1 : vector<1x128xf32>
    %34 = arith.mulf %23, %3 : vector<1x128xf32>
    %35 = arith.subf %33, %34 : vector<1x128xf32>
    %cst_25 = arith.constant 2.000000e+00 : f32
    %36 = vector.broadcast %cst_25 : f32 to vector<1x128xf32>
    %37 = arith.mulf %36, %35 : vector<1x128xf32>
    %38 = arith.mulf %23, %2 : vector<1x128xf32>
    %39 = arith.mulf %25, %1 : vector<1x128xf32>
    %40 = arith.subf %38, %39 : vector<1x128xf32>
    %cst_26 = arith.constant 2.000000e+00 : f32
    %41 = vector.broadcast %cst_26 : f32 to vector<1x128xf32>
    %42 = arith.mulf %41, %40 : vector<1x128xf32>
    %43 = arith.mulf %7, %32 : vector<1x128xf32>
    %44 = arith.addf %1, %43 : vector<1x128xf32>
    %45 = arith.mulf %25, %42 : vector<1x128xf32>
    %46 = arith.mulf %27, %37 : vector<1x128xf32>
    %47 = arith.subf %45, %46 : vector<1x128xf32>
    %48 = arith.addf %44, %47 : vector<1x128xf32>
    %49 = arith.mulf %7, %37 : vector<1x128xf32>
    %50 = arith.addf %2, %49 : vector<1x128xf32>
    %51 = arith.mulf %27, %32 : vector<1x128xf32>
    %52 = arith.mulf %23, %42 : vector<1x128xf32>
    %53 = arith.subf %51, %52 : vector<1x128xf32>
    %54 = arith.addf %50, %53 : vector<1x128xf32>
    %55 = arith.mulf %7, %42 : vector<1x128xf32>
    %56 = arith.addf %3, %55 : vector<1x128xf32>
    %57 = arith.mulf %23, %37 : vector<1x128xf32>
    %58 = arith.mulf %25, %32 : vector<1x128xf32>
    %59 = arith.subf %57, %58 : vector<1x128xf32>
    %60 = arith.addf %56, %59 : vector<1x128xf32>
    %cst_27 = arith.constant 0.000000e+00 : f32
    %61 = vector.broadcast %cst_27 : f32 to vector<1x128xf32>
    %62 = arith.subf %61, %48 : vector<1x128xf32>
    %cst_28 = arith.constant 0.000000e+00 : f32
    %63 = vector.broadcast %cst_28 : f32 to vector<1x128xf32>
    %64 = arith.subf %63, %54 : vector<1x128xf32>
    %cst_29 = arith.constant 0.000000e+00 : f32
    %65 = vector.broadcast %cst_29 : f32 to vector<1x128xf32>
    %66 = arith.subf %65, %60 : vector<1x128xf32>
    %cst_30 = arith.constant 0.000000e+00 : f32
    %67 = vector.broadcast %cst_30 : f32 to vector<1x128xf32>
    %68 = arith.subf %67, %11 : vector<1x128xf32>
    %cst_31 = arith.constant 0.000000e+00 : f32
    %69 = vector.broadcast %cst_31 : f32 to vector<1x128xf32>
    %70 = arith.subf %69, %12 : vector<1x128xf32>
    %cst_32 = arith.constant 0.000000e+00 : f32
    %71 = vector.broadcast %cst_32 : f32 to vector<1x128xf32>
    %72 = arith.subf %71, %13 : vector<1x128xf32>
    %73 = arith.mulf %70, %10 : vector<1x128xf32>
    %74 = arith.mulf %72, %9 : vector<1x128xf32>
    %75 = arith.subf %73, %74 : vector<1x128xf32>
    %cst_33 = arith.constant 2.000000e+00 : f32
    %76 = vector.broadcast %cst_33 : f32 to vector<1x128xf32>
    %77 = arith.mulf %76, %75 : vector<1x128xf32>
    %78 = arith.mulf %72, %8 : vector<1x128xf32>
    %79 = arith.mulf %68, %10 : vector<1x128xf32>
    %80 = arith.subf %78, %79 : vector<1x128xf32>
    %cst_34 = arith.constant 2.000000e+00 : f32
    %81 = vector.broadcast %cst_34 : f32 to vector<1x128xf32>
    %82 = arith.mulf %81, %80 : vector<1x128xf32>
    %83 = arith.mulf %68, %9 : vector<1x128xf32>
    %84 = arith.mulf %70, %8 : vector<1x128xf32>
    %85 = arith.subf %83, %84 : vector<1x128xf32>
    %cst_35 = arith.constant 2.000000e+00 : f32
    %86 = vector.broadcast %cst_35 : f32 to vector<1x128xf32>
    %87 = arith.mulf %86, %85 : vector<1x128xf32>
    %88 = arith.mulf %14, %77 : vector<1x128xf32>
    %89 = arith.addf %8, %88 : vector<1x128xf32>
    %90 = arith.mulf %70, %87 : vector<1x128xf32>
    %91 = arith.mulf %72, %82 : vector<1x128xf32>
    %92 = arith.subf %90, %91 : vector<1x128xf32>
    %93 = arith.addf %89, %92 : vector<1x128xf32>
    %94 = arith.mulf %14, %82 : vector<1x128xf32>
    %95 = arith.addf %9, %94 : vector<1x128xf32>
    %96 = arith.mulf %72, %77 : vector<1x128xf32>
    %97 = arith.mulf %68, %87 : vector<1x128xf32>
    %98 = arith.subf %96, %97 : vector<1x128xf32>
    %99 = arith.addf %95, %98 : vector<1x128xf32>
    %100 = arith.mulf %14, %87 : vector<1x128xf32>
    %101 = arith.addf %10, %100 : vector<1x128xf32>
    %102 = arith.mulf %68, %82 : vector<1x128xf32>
    %103 = arith.mulf %70, %77 : vector<1x128xf32>
    %104 = arith.subf %102, %103 : vector<1x128xf32>
    %105 = arith.addf %101, %104 : vector<1x128xf32>
    %cst_36 = arith.constant 0.000000e+00 : f32
    %106 = vector.broadcast %cst_36 : f32 to vector<1x128xf32>
    %107 = arith.subf %106, %93 : vector<1x128xf32>
    %cst_37 = arith.constant 0.000000e+00 : f32
    %108 = vector.broadcast %cst_37 : f32 to vector<1x128xf32>
    %109 = arith.subf %108, %99 : vector<1x128xf32>
    %cst_38 = arith.constant 0.000000e+00 : f32
    %110 = vector.broadcast %cst_38 : f32 to vector<1x128xf32>
    %111 = arith.subf %110, %105 : vector<1x128xf32>
    %112 = arith.mulf %25, %111 : vector<1x128xf32>
    %113 = arith.mulf %27, %109 : vector<1x128xf32>
    %114 = arith.subf %112, %113 : vector<1x128xf32>
    %cst_39 = arith.constant 2.000000e+00 : f32
    %115 = vector.broadcast %cst_39 : f32 to vector<1x128xf32>
    %116 = arith.mulf %115, %114 : vector<1x128xf32>
    %117 = arith.mulf %27, %107 : vector<1x128xf32>
    %118 = arith.mulf %23, %111 : vector<1x128xf32>
    %119 = arith.subf %117, %118 : vector<1x128xf32>
    %cst_40 = arith.constant 2.000000e+00 : f32
    %120 = vector.broadcast %cst_40 : f32 to vector<1x128xf32>
    %121 = arith.mulf %120, %119 : vector<1x128xf32>
    %122 = arith.mulf %23, %109 : vector<1x128xf32>
    %123 = arith.mulf %25, %107 : vector<1x128xf32>
    %124 = arith.subf %122, %123 : vector<1x128xf32>
    %cst_41 = arith.constant 2.000000e+00 : f32
    %125 = vector.broadcast %cst_41 : f32 to vector<1x128xf32>
    %126 = arith.mulf %125, %124 : vector<1x128xf32>
    %127 = arith.mulf %7, %116 : vector<1x128xf32>
    %128 = arith.addf %107, %127 : vector<1x128xf32>
    %129 = arith.mulf %25, %126 : vector<1x128xf32>
    %130 = arith.mulf %27, %121 : vector<1x128xf32>
    %131 = arith.subf %129, %130 : vector<1x128xf32>
    %132 = arith.addf %128, %131 : vector<1x128xf32>
    %133 = arith.mulf %7, %121 : vector<1x128xf32>
    %134 = arith.addf %109, %133 : vector<1x128xf32>
    %135 = arith.mulf %27, %116 : vector<1x128xf32>
    %136 = arith.mulf %23, %126 : vector<1x128xf32>
    %137 = arith.subf %135, %136 : vector<1x128xf32>
    %138 = arith.addf %134, %137 : vector<1x128xf32>
    %139 = arith.mulf %7, %126 : vector<1x128xf32>
    %140 = arith.addf %111, %139 : vector<1x128xf32>
    %141 = arith.mulf %23, %121 : vector<1x128xf32>
    %142 = arith.mulf %25, %116 : vector<1x128xf32>
    %143 = arith.subf %141, %142 : vector<1x128xf32>
    %144 = arith.addf %140, %143 : vector<1x128xf32>
    %145 = arith.addf %62, %132 : vector<1x128xf32>
    %146 = arith.addf %64, %138 : vector<1x128xf32>
    %147 = arith.addf %66, %144 : vector<1x128xf32>
    %148 = arith.mulf %7, %68 : vector<1x128xf32>
    %149 = arith.mulf %23, %14 : vector<1x128xf32>
    %150 = arith.addf %148, %149 : vector<1x128xf32>
    %151 = arith.mulf %25, %72 : vector<1x128xf32>
    %152 = arith.addf %150, %151 : vector<1x128xf32>
    %153 = arith.mulf %27, %70 : vector<1x128xf32>
    %154 = arith.subf %152, %153 : vector<1x128xf32>
    %155 = arith.mulf %7, %70 : vector<1x128xf32>
    %156 = arith.mulf %23, %72 : vector<1x128xf32>
    %157 = arith.subf %155, %156 : vector<1x128xf32>
    %158 = arith.mulf %25, %14 : vector<1x128xf32>
    %159 = arith.addf %157, %158 : vector<1x128xf32>
    %160 = arith.mulf %27, %68 : vector<1x128xf32>
    %161 = arith.addf %159, %160 : vector<1x128xf32>
    %162 = arith.mulf %7, %72 : vector<1x128xf32>
    %163 = arith.mulf %23, %70 : vector<1x128xf32>
    %164 = arith.addf %162, %163 : vector<1x128xf32>
    %165 = arith.mulf %25, %68 : vector<1x128xf32>
    %166 = arith.subf %164, %165 : vector<1x128xf32>
    %167 = arith.mulf %27, %14 : vector<1x128xf32>
    %168 = arith.addf %166, %167 : vector<1x128xf32>
    %169 = arith.mulf %7, %14 : vector<1x128xf32>
    %170 = arith.mulf %23, %68 : vector<1x128xf32>
    %171 = arith.subf %169, %170 : vector<1x128xf32>
    %172 = arith.mulf %25, %70 : vector<1x128xf32>
    %173 = arith.subf %171, %172 : vector<1x128xf32>
    %174 = arith.mulf %27, %72 : vector<1x128xf32>
    %175 = arith.subf %173, %174 : vector<1x128xf32>
    %176 = arith.mulf %161, %17 : vector<1x128xf32>
    %177 = arith.mulf %168, %16 : vector<1x128xf32>
    %178 = arith.subf %176, %177 : vector<1x128xf32>
    %cst_42 = arith.constant 2.000000e+00 : f32
    %179 = vector.broadcast %cst_42 : f32 to vector<1x128xf32>
    %180 = arith.mulf %179, %178 : vector<1x128xf32>
    %181 = arith.mulf %168, %15 : vector<1x128xf32>
    %182 = arith.mulf %154, %17 : vector<1x128xf32>
    %183 = arith.subf %181, %182 : vector<1x128xf32>
    %cst_43 = arith.constant 2.000000e+00 : f32
    %184 = vector.broadcast %cst_43 : f32 to vector<1x128xf32>
    %185 = arith.mulf %184, %183 : vector<1x128xf32>
    %186 = arith.mulf %154, %16 : vector<1x128xf32>
    %187 = arith.mulf %161, %15 : vector<1x128xf32>
    %188 = arith.subf %186, %187 : vector<1x128xf32>
    %cst_44 = arith.constant 2.000000e+00 : f32
    %189 = vector.broadcast %cst_44 : f32 to vector<1x128xf32>
    %190 = arith.mulf %189, %188 : vector<1x128xf32>
    %191 = arith.mulf %175, %180 : vector<1x128xf32>
    %192 = arith.addf %15, %191 : vector<1x128xf32>
    %193 = arith.mulf %161, %190 : vector<1x128xf32>
    %194 = arith.mulf %168, %185 : vector<1x128xf32>
    %195 = arith.subf %193, %194 : vector<1x128xf32>
    %196 = arith.addf %192, %195 : vector<1x128xf32>
    %197 = arith.mulf %175, %185 : vector<1x128xf32>
    %198 = arith.addf %16, %197 : vector<1x128xf32>
    %199 = arith.mulf %168, %180 : vector<1x128xf32>
    %200 = arith.mulf %154, %190 : vector<1x128xf32>
    %201 = arith.subf %199, %200 : vector<1x128xf32>
    %202 = arith.addf %198, %201 : vector<1x128xf32>
    %203 = arith.mulf %175, %190 : vector<1x128xf32>
    %204 = arith.addf %17, %203 : vector<1x128xf32>
    %205 = arith.mulf %154, %185 : vector<1x128xf32>
    %206 = arith.mulf %161, %180 : vector<1x128xf32>
    %207 = arith.subf %205, %206 : vector<1x128xf32>
    %208 = arith.addf %204, %207 : vector<1x128xf32>
    %209 = arith.addf %145, %196 : vector<1x128xf32>
    %210 = arith.addf %146, %202 : vector<1x128xf32>
    %211 = arith.addf %147, %208 : vector<1x128xf32>
    %212 = arith.mulf %175, %18 : vector<1x128xf32>
    %213 = arith.mulf %154, %21 : vector<1x128xf32>
    %214 = arith.addf %212, %213 : vector<1x128xf32>
    %215 = arith.mulf %161, %20 : vector<1x128xf32>
    %216 = arith.addf %214, %215 : vector<1x128xf32>
    %217 = arith.mulf %168, %19 : vector<1x128xf32>
    %218 = arith.subf %216, %217 : vector<1x128xf32>
    %219 = arith.mulf %175, %19 : vector<1x128xf32>
    %220 = arith.mulf %154, %20 : vector<1x128xf32>
    %221 = arith.subf %219, %220 : vector<1x128xf32>
    %222 = arith.mulf %161, %21 : vector<1x128xf32>
    %223 = arith.addf %221, %222 : vector<1x128xf32>
    %224 = arith.mulf %168, %18 : vector<1x128xf32>
    %225 = arith.addf %223, %224 : vector<1x128xf32>
    %226 = arith.mulf %175, %20 : vector<1x128xf32>
    %227 = arith.mulf %154, %19 : vector<1x128xf32>
    %228 = arith.addf %226, %227 : vector<1x128xf32>
    %229 = arith.mulf %161, %18 : vector<1x128xf32>
    %230 = arith.subf %228, %229 : vector<1x128xf32>
    %231 = arith.mulf %168, %21 : vector<1x128xf32>
    %232 = arith.addf %230, %231 : vector<1x128xf32>
    %233 = arith.mulf %175, %21 : vector<1x128xf32>
    %234 = arith.mulf %154, %18 : vector<1x128xf32>
    %235 = arith.subf %233, %234 : vector<1x128xf32>
    %236 = arith.mulf %161, %19 : vector<1x128xf32>
    %237 = arith.subf %235, %236 : vector<1x128xf32>
    %238 = arith.mulf %168, %20 : vector<1x128xf32>
    %239 = arith.subf %237, %238 : vector<1x128xf32>
    %240 = arith.mulf %218, %218 : vector<1x128xf32>
    %241 = arith.mulf %225, %225 : vector<1x128xf32>
    %242 = arith.addf %240, %241 : vector<1x128xf32>
    %243 = arith.mulf %232, %232 : vector<1x128xf32>
    %244 = arith.addf %242, %243 : vector<1x128xf32>
    %245 = math.sqrt %244 : vector<1x128xf32>
    %cst_45 = arith.constant 9.99999997E-7 : f32
    %246 = vector.broadcast %cst_45 : f32 to vector<1x128xf32>
    %247 = arith.cmpf ogt, %245, %246 : vector<1x128xf32>
    %cst_46 = arith.constant 1.000000e+00 : f32
    %248 = vector.broadcast %cst_46 : f32 to vector<1x128xf32>
    %249 = arith.select %247, %245, %248 : vector<1x128xi1>, vector<1x128xf32>
    %250 = math.absf %239 : vector<1x128xf32>
    %cst_47 = arith.constant 9.99999997E-7 : f32
    %251 = vector.broadcast %cst_47 : f32 to vector<1x128xf32>
    %252 = arith.cmpf ogt, %250, %251 : vector<1x128xf32>
    %cst_48 = arith.constant 1.000000e+00 : f32
    %253 = vector.broadcast %cst_48 : f32 to vector<1x128xf32>
    %254 = arith.select %252, %239, %253 : vector<1x128xi1>, vector<1x128xf32>
    %255 = arith.divf %245, %254 : vector<1x128xf32>
    %256 = math.absf %255 : vector<1x128xf32>
    %cst_49 = arith.constant 1.000000e+00 : f32
    %257 = vector.broadcast %cst_49 : f32 to vector<1x128xf32>
    %258 = arith.cmpf ogt, %256, %257 : vector<1x128xf32>
    %cst_50 = arith.constant 1.000000e+00 : f32
    %259 = vector.broadcast %cst_50 : f32 to vector<1x128xf32>
    %260 = arith.maximumf %256, %259 : vector<1x128xf32>
    %cst_51 = arith.constant 1.000000e+00 : f32
    %261 = vector.broadcast %cst_51 : f32 to vector<1x128xf32>
    %262 = arith.divf %261, %260 : vector<1x128xf32>
    %263 = arith.select %258, %262, %256 : vector<1x128xi1>, vector<1x128xf32>
    %264 = arith.mulf %263, %263 : vector<1x128xf32>
    %cst_52 = arith.constant 1.000000e+00 : f32
    %265 = vector.broadcast %cst_52 : f32 to vector<1x128xf32>
    %266 = arith.addf %265, %264 : vector<1x128xf32>
    %267 = math.sqrt %266 : vector<1x128xf32>
    %cst_53 = arith.constant 1.000000e+00 : f32
    %268 = vector.broadcast %cst_53 : f32 to vector<1x128xf32>
    %269 = arith.addf %268, %267 : vector<1x128xf32>
    %270 = arith.divf %263, %269 : vector<1x128xf32>
    %271 = arith.mulf %270, %270 : vector<1x128xf32>
    %cst_54 = arith.constant 1.000000e+00 : f32
    %272 = vector.broadcast %cst_54 : f32 to vector<1x128xf32>
    %273 = arith.addf %272, %271 : vector<1x128xf32>
    %274 = math.sqrt %273 : vector<1x128xf32>
    %cst_55 = arith.constant 1.000000e+00 : f32
    %275 = vector.broadcast %cst_55 : f32 to vector<1x128xf32>
    %276 = arith.addf %275, %274 : vector<1x128xf32>
    %277 = arith.divf %270, %276 : vector<1x128xf32>
    %278 = arith.mulf %277, %277 : vector<1x128xf32>
    %cst_56 = arith.constant 0.111111112 : f32
    %279 = vector.broadcast %cst_56 : f32 to vector<1x128xf32>
    %280 = arith.mulf %278, %279 : vector<1x128xf32>
    %cst_57 = arith.constant -0.142857149 : f32
    %281 = vector.broadcast %cst_57 : f32 to vector<1x128xf32>
    %282 = arith.addf %281, %280 : vector<1x128xf32>
    %283 = arith.mulf %278, %282 : vector<1x128xf32>
    %cst_58 = arith.constant 2.000000e-01 : f32
    %284 = vector.broadcast %cst_58 : f32 to vector<1x128xf32>
    %285 = arith.addf %284, %283 : vector<1x128xf32>
    %286 = arith.mulf %278, %285 : vector<1x128xf32>
    %cst_59 = arith.constant -0.333333343 : f32
    %287 = vector.broadcast %cst_59 : f32 to vector<1x128xf32>
    %288 = arith.addf %287, %286 : vector<1x128xf32>
    %289 = arith.mulf %278, %288 : vector<1x128xf32>
    %cst_60 = arith.constant 1.000000e+00 : f32
    %290 = vector.broadcast %cst_60 : f32 to vector<1x128xf32>
    %291 = arith.addf %290, %289 : vector<1x128xf32>
    %292 = arith.mulf %277, %291 : vector<1x128xf32>
    %cst_61 = arith.constant 4.000000e+00 : f32
    %293 = vector.broadcast %cst_61 : f32 to vector<1x128xf32>
    %294 = arith.mulf %293, %292 : vector<1x128xf32>
    %cst_62 = arith.constant 1.57079637 : f32
    %295 = vector.broadcast %cst_62 : f32 to vector<1x128xf32>
    %296 = arith.subf %295, %294 : vector<1x128xf32>
    %297 = arith.select %258, %296, %294 : vector<1x128xi1>, vector<1x128xf32>
    %cst_63 = arith.constant 0.000000e+00 : f32
    %298 = vector.broadcast %cst_63 : f32 to vector<1x128xf32>
    %299 = arith.cmpf olt, %255, %298 : vector<1x128xf32>
    %cst_64 = arith.constant 0.000000e+00 : f32
    %300 = vector.broadcast %cst_64 : f32 to vector<1x128xf32>
    %301 = arith.subf %300, %297 : vector<1x128xf32>
    %302 = arith.select %299, %301, %297 : vector<1x128xi1>, vector<1x128xf32>
    %cst_65 = arith.constant 2.000000e+00 : f32
    %303 = vector.broadcast %cst_65 : f32 to vector<1x128xf32>
    %304 = arith.mulf %303, %302 : vector<1x128xf32>
    %305 = arith.divf %304, %249 : vector<1x128xf32>
    %cst_66 = arith.constant 0.000000e+00 : f32
    %306 = vector.broadcast %cst_66 : f32 to vector<1x128xf32>
    %307 = arith.cmpf oge, %239, %306 : vector<1x128xf32>
    %cst_67 = arith.constant 1.000000e+00 : f32
    %cst_68 = arith.constant -1.000000e+00 : f32
    %308 = vector.broadcast %cst_67 : f32 to vector<1x128xf32>
    %309 = vector.broadcast %cst_68 : f32 to vector<1x128xf32>
    %310 = arith.select %307, %308, %309 : vector<1x128xi1>, vector<1x128xf32>
    %cst_69 = arith.constant 3.14159274 : f32
    %311 = vector.broadcast %cst_69 : f32 to vector<1x128xf32>
    %312 = arith.mulf %310, %311 : vector<1x128xf32>
    %313 = arith.divf %312, %249 : vector<1x128xf32>
    %cst_70 = arith.constant 2.000000e+00 : f32
    %314 = vector.broadcast %cst_70 : f32 to vector<1x128xf32>
    %315 = arith.divf %314, %254 : vector<1x128xf32>
    %cst_71 = arith.constant 0.666666686 : f32
    %316 = vector.broadcast %cst_71 : f32 to vector<1x128xf32>
    %317 = arith.mulf %316, %244 : vector<1x128xf32>
    %318 = arith.mulf %254, %254 : vector<1x128xf32>
    %319 = arith.mulf %318, %254 : vector<1x128xf32>
    %320 = arith.divf %317, %319 : vector<1x128xf32>
    %321 = arith.subf %315, %320 : vector<1x128xf32>
    %cst_72 = arith.constant 9.99999997E-7 : f32
    %322 = vector.broadcast %cst_72 : f32 to vector<1x128xf32>
    %323 = arith.cmpf ogt, %245, %322 : vector<1x128xf32>
    %324 = math.absf %239 : vector<1x128xf32>
    %cst_73 = arith.constant 9.99999997E-7 : f32
    %325 = vector.broadcast %cst_73 : f32 to vector<1x128xf32>
    %326 = arith.cmpf ogt, %324, %325 : vector<1x128xf32>
    %327 = arith.select %326, %305, %313 : vector<1x128xi1>, vector<1x128xf32>
    %328 = arith.select %323, %327, %321 : vector<1x128xi1>, vector<1x128xf32>
    %329 = arith.mulf %328, %218 : vector<1x128xf32>
    %330 = arith.mulf %328, %225 : vector<1x128xf32>
    %331 = arith.mulf %328, %232 : vector<1x128xf32>
    %332 = arith.mulf %329, %329 : vector<1x128xf32>
    %333 = arith.mulf %330, %330 : vector<1x128xf32>
    %334 = arith.addf %332, %333 : vector<1x128xf32>
    %335 = arith.mulf %331, %331 : vector<1x128xf32>
    %336 = arith.addf %334, %335 : vector<1x128xf32>
    %337 = math.sqrt %336 : vector<1x128xf32>
    %338 = arith.mulf %218, %218 : vector<1x128xf32>
    %339 = arith.mulf %225, %225 : vector<1x128xf32>
    %340 = arith.addf %338, %339 : vector<1x128xf32>
    %341 = arith.mulf %232, %232 : vector<1x128xf32>
    %342 = arith.addf %340, %341 : vector<1x128xf32>
    %343 = math.sqrt %342 : vector<1x128xf32>
    %344 = math.absf %239 : vector<1x128xf32>
    %cst_74 = arith.constant 9.99999997E-7 : f32
    %345 = vector.broadcast %cst_74 : f32 to vector<1x128xf32>
    %346 = arith.cmpf ogt, %343, %345 : vector<1x128xf32>
    %cst_75 = arith.constant 1.000000e+00 : f32
    %347 = vector.broadcast %cst_75 : f32 to vector<1x128xf32>
    %348 = arith.select %346, %343, %347 : vector<1x128xi1>, vector<1x128xf32>
    %349 = arith.divf %344, %348 : vector<1x128xf32>
    %cst_76 = arith.constant 9.99999997E-7 : f32
    %350 = vector.broadcast %cst_76 : f32 to vector<1x128xf32>
    %351 = arith.cmpf ogt, %337, %350 : vector<1x128xf32>
    %cst_77 = arith.constant 1.000000e+00 : f32
    %352 = vector.broadcast %cst_77 : f32 to vector<1x128xf32>
    %353 = arith.select %351, %337, %352 : vector<1x128xi1>, vector<1x128xf32>
    %cst_78 = arith.constant 9.99999997E-7 : f32
    %354 = vector.broadcast %cst_78 : f32 to vector<1x128xf32>
    %355 = arith.cmpf ogt, %337, %354 : vector<1x128xf32>
    %cst_79 = arith.constant 5.000000e-01 : f32
    %356 = vector.broadcast %cst_79 : f32 to vector<1x128xf32>
    %357 = arith.mulf %356, %353 : vector<1x128xf32>
    %358 = arith.mulf %357, %349 : vector<1x128xf32>
    %cst_80 = arith.constant 1.000000e+00 : f32
    %359 = vector.broadcast %cst_80 : f32 to vector<1x128xf32>
    %360 = arith.subf %359, %358 : vector<1x128xf32>
    %361 = arith.mulf %353, %353 : vector<1x128xf32>
    %362 = arith.divf %360, %361 : vector<1x128xf32>
    %cst_81 = arith.constant 0.0833333358 : f32
    %363 = vector.broadcast %cst_81 : f32 to vector<1x128xf32>
    %364 = arith.select %355, %362, %363 : vector<1x128xi1>, vector<1x128xf32>
    %365 = arith.mulf %330, %211 : vector<1x128xf32>
    %366 = arith.mulf %331, %210 : vector<1x128xf32>
    %367 = arith.subf %365, %366 : vector<1x128xf32>
    %368 = arith.mulf %331, %209 : vector<1x128xf32>
    %369 = arith.mulf %329, %211 : vector<1x128xf32>
    %370 = arith.subf %368, %369 : vector<1x128xf32>
    %371 = arith.mulf %329, %210 : vector<1x128xf32>
    %372 = arith.mulf %330, %209 : vector<1x128xf32>
    %373 = arith.subf %371, %372 : vector<1x128xf32>
    %374 = arith.mulf %330, %373 : vector<1x128xf32>
    %375 = arith.mulf %331, %370 : vector<1x128xf32>
    %376 = arith.subf %374, %375 : vector<1x128xf32>
    %377 = arith.mulf %331, %367 : vector<1x128xf32>
    %378 = arith.mulf %329, %373 : vector<1x128xf32>
    %379 = arith.subf %377, %378 : vector<1x128xf32>
    %380 = arith.mulf %329, %370 : vector<1x128xf32>
    %381 = arith.mulf %330, %367 : vector<1x128xf32>
    %382 = arith.subf %380, %381 : vector<1x128xf32>
    %cst_82 = arith.constant 5.000000e-01 : f32
    %383 = vector.broadcast %cst_82 : f32 to vector<1x128xf32>
    %384 = arith.mulf %383, %367 : vector<1x128xf32>
    %385 = arith.subf %209, %384 : vector<1x128xf32>
    %386 = arith.mulf %364, %376 : vector<1x128xf32>
    %387 = arith.addf %385, %386 : vector<1x128xf32>
    %cst_83 = arith.constant 5.000000e-01 : f32
    %388 = vector.broadcast %cst_83 : f32 to vector<1x128xf32>
    %389 = arith.mulf %388, %370 : vector<1x128xf32>
    %390 = arith.subf %210, %389 : vector<1x128xf32>
    %391 = arith.mulf %364, %379 : vector<1x128xf32>
    %392 = arith.addf %390, %391 : vector<1x128xf32>
    %cst_84 = arith.constant 5.000000e-01 : f32
    %393 = vector.broadcast %cst_84 : f32 to vector<1x128xf32>
    %394 = arith.mulf %393, %373 : vector<1x128xf32>
    %395 = arith.subf %211, %394 : vector<1x128xf32>
    %396 = arith.mulf %364, %382 : vector<1x128xf32>
    %397 = arith.addf %395, %396 : vector<1x128xf32>
    %398 = tpu.concatenate %387, %392, %397, %329, %330, %331, %0, %0 in 0 : vector<1x128xf32>, vector<1x128xf32>, vector<1x128xf32>, vector<1x128xf32>, vector<1x128xf32>, vector<1x128xf32>, vector<1x128xf32>, vector<1x128xf32> -> vector<8x128xf32>
    %c0_85 = arith.constant 0 : index
    %c0_86 = arith.constant 0 : index
    %399 = vector.load %arg1[%c0_85, %c0_86] : memref<24x128xf32, #tpu.memory_space<vmem>>, vector<8x128xf32>
    tpu.vector_store %arg1[%c0_85, %c0_86], %398 {strides = array<i32>} : memref<24x128xf32, #tpu.memory_space<vmem>>, vector<8x128xf32>,
    %c24 = arith.constant 24 : index
    %c0_87 = arith.constant 0 : index
    %400 = vector.load %arg0[%c24, %c0_87] : memref<64x128xf32, #tpu.memory_space<vmem>>, vector<16x128xf32>
    %c127_i32 = arith.constant 127 : i32
    %401 = tpu.dynamic_rotate %400 by %c127_i32 dim 1 : vector<16x128xf32>, i32 -> vector<16x128xf32>
    %402 = vector.extract_strided_slice %400 {offsets = [0, 0], sizes = [1, 128], strides = [1, 1]} : vector<16x128xf32> to vector<1x128xf32>
    %403 = vector.extract_strided_slice %400 {offsets = [1, 0], sizes = [1, 128], strides = [1, 1]} : vector<16x128xf32> to vector<1x128xf32>
    %404 = vector.extract_strided_slice %400 {offsets = [2, 0], sizes = [1, 128], strides = [1, 1]} : vector<16x128xf32> to vector<1x128xf32>
    %405 = vector.extract_strided_slice %400 {offsets = [3, 0], sizes = [1, 128], strides = [1, 1]} : vector<16x128xf32> to vector<1x128xf32>
    %406 = vector.extract_strided_slice %400 {offsets = [4, 0], sizes = [1, 128], strides = [1, 1]} : vector<16x128xf32> to vector<1x128xf32>
    %407 = vector.extract_strided_slice %400 {offsets = [5, 0], sizes = [1, 128], strides = [1, 1]} : vector<16x128xf32> to vector<1x128xf32>
    %408 = vector.extract_strided_slice %400 {offsets = [6, 0], sizes = [1, 128], strides = [1, 1]} : vector<16x128xf32> to vector<1x128xf32>
    %409 = vector.extract_strided_slice %400 {offsets = [8, 0], sizes = [1, 128], strides = [1, 1]} : vector<16x128xf32> to vector<1x128xf32>
    %410 = vector.extract_strided_slice %400 {offsets = [9, 0], sizes = [1, 128], strides = [1, 1]} : vector<16x128xf32> to vector<1x128xf32>
    %411 = vector.extract_strided_slice %400 {offsets = [10, 0], sizes = [1, 128], strides = [1, 1]} : vector<16x128xf32> to vector<1x128xf32>
    %412 = vector.extract_strided_slice %401 {offsets = [0, 0], sizes = [1, 128], strides = [1, 1]} : vector<16x128xf32> to vector<1x128xf32>
    %413 = vector.extract_strided_slice %401 {offsets = [1, 0], sizes = [1, 128], strides = [1, 1]} : vector<16x128xf32> to vector<1x128xf32>
    %414 = vector.extract_strided_slice %401 {offsets = [2, 0], sizes = [1, 128], strides = [1, 1]} : vector<16x128xf32> to vector<1x128xf32>
    %415 = vector.extract_strided_slice %401 {offsets = [3, 0], sizes = [1, 128], strides = [1, 1]} : vector<16x128xf32> to vector<1x128xf32>
    %416 = vector.extract_strided_slice %401 {offsets = [4, 0], sizes = [1, 128], strides = [1, 1]} : vector<16x128xf32> to vector<1x128xf32>
    %417 = vector.extract_strided_slice %401 {offsets = [5, 0], sizes = [1, 128], strides = [1, 1]} : vector<16x128xf32> to vector<1x128xf32>
    %418 = vector.extract_strided_slice %401 {offsets = [6, 0], sizes = [1, 128], strides = [1, 1]} : vector<16x128xf32> to vector<1x128xf32>
    %419 = vector.extract_strided_slice %401 {offsets = [8, 0], sizes = [1, 128], strides = [1, 1]} : vector<16x128xf32> to vector<1x128xf32>
    %420 = vector.extract_strided_slice %401 {offsets = [9, 0], sizes = [1, 128], strides = [1, 1]} : vector<16x128xf32> to vector<1x128xf32>
    %421 = vector.extract_strided_slice %401 {offsets = [10, 0], sizes = [1, 128], strides = [1, 1]} : vector<16x128xf32> to vector<1x128xf32>
    %c40 = arith.constant 40 : index
    %c0_88 = arith.constant 0 : index
    %422 = vector.load %arg0[%c40, %c0_88] : memref<64x128xf32, #tpu.memory_space<vmem>>, vector<1x128xf32>
    %c41 = arith.constant 41 : index
    %c0_89 = arith.constant 0 : index
    %423 = vector.load %arg0[%c41, %c0_89] : memref<64x128xf32, #tpu.memory_space<vmem>>, vector<1x128xf32>
    %c42 = arith.constant 42 : index
    %c0_90 = arith.constant 0 : index
    %424 = vector.load %arg0[%c42, %c0_90] : memref<64x128xf32, #tpu.memory_space<vmem>>, vector<1x128xf32>
    %c43 = arith.constant 43 : index
    %c0_91 = arith.constant 0 : index
    %425 = vector.load %arg0[%c43, %c0_91] : memref<64x128xf32, #tpu.memory_space<vmem>>, vector<1x128xf32>
    %c48 = arith.constant 48 : index
    %c0_92 = arith.constant 0 : index
    %426 = vector.load %arg0[%c48, %c0_92] : memref<64x128xf32, #tpu.memory_space<vmem>>, vector<1x128xf32>
    %c49 = arith.constant 49 : index
    %c0_93 = arith.constant 0 : index
    %427 = vector.load %arg0[%c49, %c0_93] : memref<64x128xf32, #tpu.memory_space<vmem>>, vector<1x128xf32>
    %c50 = arith.constant 50 : index
    %c0_94 = arith.constant 0 : index
    %428 = vector.load %arg0[%c50, %c0_94] : memref<64x128xf32, #tpu.memory_space<vmem>>, vector<1x128xf32>
    %c56 = arith.constant 56 : index
    %c0_95 = arith.constant 0 : index
    %429 = vector.load %arg0[%c56, %c0_95] : memref<64x128xf32, #tpu.memory_space<vmem>>, vector<1x128xf32>
    %c57 = arith.constant 57 : index
    %c0_96 = arith.constant 0 : index
    %430 = vector.load %arg0[%c57, %c0_96] : memref<64x128xf32, #tpu.memory_space<vmem>>, vector<1x128xf32>
    %c58 = arith.constant 58 : index
    %c0_97 = arith.constant 0 : index
    %431 = vector.load %arg0[%c58, %c0_97] : memref<64x128xf32, #tpu.memory_space<vmem>>, vector<1x128xf32>
    %c59 = arith.constant 59 : index
    %c0_98 = arith.constant 0 : index
    %432 = vector.load %arg0[%c59, %c0_98] : memref<64x128xf32, #tpu.memory_space<vmem>>, vector<1x128xf32>
    %433 = arith.subf %419, %409 : vector<1x128xf32>
    %434 = arith.subf %426, %433 : vector<1x128xf32>
    %435 = arith.subf %420, %410 : vector<1x128xf32>
    %436 = arith.subf %427, %435 : vector<1x128xf32>
    %437 = arith.subf %421, %411 : vector<1x128xf32>
    %438 = arith.subf %428, %437 : vector<1x128xf32>
    %cst_99 = arith.constant 0.000000e+00 : f32
    %439 = vector.broadcast %cst_99 : f32 to vector<1x128xf32>
    %440 = arith.subf %439, %422 : vector<1x128xf32>
    %cst_100 = arith.constant 0.000000e+00 : f32
    %441 = vector.broadcast %cst_100 : f32 to vector<1x128xf32>
    %442 = arith.subf %441, %423 : vector<1x128xf32>
    %cst_101 = arith.constant 0.000000e+00 : f32
    %443 = vector.broadcast %cst_101 : f32 to vector<1x128xf32>
    %444 = arith.subf %443, %424 : vector<1x128xf32>
    %cst_102 = arith.constant 0.000000e+00 : f32
    %445 = vector.broadcast %cst_102 : f32 to vector<1x128xf32>
    %446 = arith.subf %445, %405 : vector<1x128xf32>
    %cst_103 = arith.constant 0.000000e+00 : f32
    %447 = vector.broadcast %cst_103 : f32 to vector<1x128xf32>
    %448 = arith.subf %447, %406 : vector<1x128xf32>
    %cst_104 = arith.constant 0.000000e+00 : f32
    %449 = vector.broadcast %cst_104 : f32 to vector<1x128xf32>
    %450 = arith.subf %449, %407 : vector<1x128xf32>
    %451 = arith.mulf %425, %446 : vector<1x128xf32>
    %452 = arith.mulf %440, %408 : vector<1x128xf32>
    %453 = arith.addf %451, %452 : vector<1x128xf32>
    %454 = arith.mulf %442, %450 : vector<1x128xf32>
    %455 = arith.addf %453, %454 : vector<1x128xf32>
    %456 = arith.mulf %444, %448 : vector<1x128xf32>
    %457 = arith.subf %455, %456 : vector<1x128xf32>
    %458 = arith.mulf %425, %448 : vector<1x128xf32>
    %459 = arith.mulf %440, %450 : vector<1x128xf32>
    %460 = arith.subf %458, %459 : vector<1x128xf32>
    %461 = arith.mulf %442, %408 : vector<1x128xf32>
    %462 = arith.addf %460, %461 : vector<1x128xf32>
    %463 = arith.mulf %444, %446 : vector<1x128xf32>
    %464 = arith.addf %462, %463 : vector<1x128xf32>
    %465 = arith.mulf %425, %450 : vector<1x128xf32>
    %466 = arith.mulf %440, %448 : vector<1x128xf32>
    %467 = arith.addf %465, %466 : vector<1x128xf32>
    %468 = arith.mulf %442, %446 : vector<1x128xf32>
    %469 = arith.subf %467, %468 : vector<1x128xf32>
    %470 = arith.mulf %444, %408 : vector<1x128xf32>
    %471 = arith.addf %469, %470 : vector<1x128xf32>
    %472 = arith.mulf %425, %408 : vector<1x128xf32>
    %473 = arith.mulf %440, %446 : vector<1x128xf32>
    %474 = arith.subf %472, %473 : vector<1x128xf32>
    %475 = arith.mulf %442, %448 : vector<1x128xf32>
    %476 = arith.subf %474, %475 : vector<1x128xf32>
    %477 = arith.mulf %444, %450 : vector<1x128xf32>
    %478 = arith.subf %476, %477 : vector<1x128xf32>
    %479 = arith.mulf %478, %415 : vector<1x128xf32>
    %480 = arith.mulf %457, %418 : vector<1x128xf32>
    %481 = arith.addf %479, %480 : vector<1x128xf32>
    %482 = arith.mulf %464, %417 : vector<1x128xf32>
    %483 = arith.addf %481, %482 : vector<1x128xf32>
    %484 = arith.mulf %471, %416 : vector<1x128xf32>
    %485 = arith.subf %483, %484 : vector<1x128xf32>
    %486 = arith.mulf %478, %416 : vector<1x128xf32>
    %487 = arith.mulf %457, %417 : vector<1x128xf32>
    %488 = arith.subf %486, %487 : vector<1x128xf32>
    %489 = arith.mulf %464, %418 : vector<1x128xf32>
    %490 = arith.addf %488, %489 : vector<1x128xf32>
    %491 = arith.mulf %471, %415 : vector<1x128xf32>
    %492 = arith.addf %490, %491 : vector<1x128xf32>
    %493 = arith.mulf %478, %417 : vector<1x128xf32>
    %494 = arith.mulf %457, %416 : vector<1x128xf32>
    %495 = arith.addf %493, %494 : vector<1x128xf32>
    %496 = arith.mulf %464, %415 : vector<1x128xf32>
    %497 = arith.subf %495, %496 : vector<1x128xf32>
    %498 = arith.mulf %471, %418 : vector<1x128xf32>
    %499 = arith.addf %497, %498 : vector<1x128xf32>
    %500 = arith.mulf %478, %418 : vector<1x128xf32>
    %501 = arith.mulf %457, %415 : vector<1x128xf32>
    %502 = arith.subf %500, %501 : vector<1x128xf32>
    %503 = arith.mulf %464, %416 : vector<1x128xf32>
    %504 = arith.subf %502, %503 : vector<1x128xf32>
    %505 = arith.mulf %471, %417 : vector<1x128xf32>
    %506 = arith.subf %504, %505 : vector<1x128xf32>
    %507 = arith.mulf %485, %485 : vector<1x128xf32>
    %508 = arith.mulf %492, %492 : vector<1x128xf32>
    %509 = arith.addf %507, %508 : vector<1x128xf32>
    %510 = arith.mulf %499, %499 : vector<1x128xf32>
    %511 = arith.addf %509, %510 : vector<1x128xf32>
    %512 = math.sqrt %511 : vector<1x128xf32>
    %cst_105 = arith.constant 9.99999997E-7 : f32
    %513 = vector.broadcast %cst_105 : f32 to vector<1x128xf32>
    %514 = arith.cmpf ogt, %512, %513 : vector<1x128xf32>
    %cst_106 = arith.constant 1.000000e+00 : f32
    %515 = vector.broadcast %cst_106 : f32 to vector<1x128xf32>
    %516 = arith.select %514, %512, %515 : vector<1x128xi1>, vector<1x128xf32>
    %517 = math.absf %506 : vector<1x128xf32>
    %cst_107 = arith.constant 9.99999997E-7 : f32
    %518 = vector.broadcast %cst_107 : f32 to vector<1x128xf32>
    %519 = arith.cmpf ogt, %517, %518 : vector<1x128xf32>
    %cst_108 = arith.constant 1.000000e+00 : f32
    %520 = vector.broadcast %cst_108 : f32 to vector<1x128xf32>
    %521 = arith.select %519, %506, %520 : vector<1x128xi1>, vector<1x128xf32>
    %522 = arith.divf %512, %521 : vector<1x128xf32>
    %523 = math.absf %522 : vector<1x128xf32>
    %cst_109 = arith.constant 1.000000e+00 : f32
    %524 = vector.broadcast %cst_109 : f32 to vector<1x128xf32>
    %525 = arith.cmpf ogt, %523, %524 : vector<1x128xf32>
    %cst_110 = arith.constant 1.000000e+00 : f32
    %526 = vector.broadcast %cst_110 : f32 to vector<1x128xf32>
    %527 = arith.maximumf %523, %526 : vector<1x128xf32>
    %cst_111 = arith.constant 1.000000e+00 : f32
    %528 = vector.broadcast %cst_111 : f32 to vector<1x128xf32>
    %529 = arith.divf %528, %527 : vector<1x128xf32>
    %530 = arith.select %525, %529, %523 : vector<1x128xi1>, vector<1x128xf32>
    %531 = arith.mulf %530, %530 : vector<1x128xf32>
    %cst_112 = arith.constant 1.000000e+00 : f32
    %532 = vector.broadcast %cst_112 : f32 to vector<1x128xf32>
    %533 = arith.addf %532, %531 : vector<1x128xf32>
    %534 = math.sqrt %533 : vector<1x128xf32>
    %cst_113 = arith.constant 1.000000e+00 : f32
    %535 = vector.broadcast %cst_113 : f32 to vector<1x128xf32>
    %536 = arith.addf %535, %534 : vector<1x128xf32>
    %537 = arith.divf %530, %536 : vector<1x128xf32>
    %538 = arith.mulf %537, %537 : vector<1x128xf32>
    %cst_114 = arith.constant 1.000000e+00 : f32
    %539 = vector.broadcast %cst_114 : f32 to vector<1x128xf32>
    %540 = arith.addf %539, %538 : vector<1x128xf32>
    %541 = math.sqrt %540 : vector<1x128xf32>
    %cst_115 = arith.constant 1.000000e+00 : f32
    %542 = vector.broadcast %cst_115 : f32 to vector<1x128xf32>
    %543 = arith.addf %542, %541 : vector<1x128xf32>
    %544 = arith.divf %537, %543 : vector<1x128xf32>
    %545 = arith.mulf %544, %544 : vector<1x128xf32>
    %cst_116 = arith.constant 0.111111112 : f32
    %546 = vector.broadcast %cst_116 : f32 to vector<1x128xf32>
    %547 = arith.mulf %545, %546 : vector<1x128xf32>
    %cst_117 = arith.constant -0.142857149 : f32
    %548 = vector.broadcast %cst_117 : f32 to vector<1x128xf32>
    %549 = arith.addf %548, %547 : vector<1x128xf32>
    %550 = arith.mulf %545, %549 : vector<1x128xf32>
    %cst_118 = arith.constant 2.000000e-01 : f32
    %551 = vector.broadcast %cst_118 : f32 to vector<1x128xf32>
    %552 = arith.addf %551, %550 : vector<1x128xf32>
    %553 = arith.mulf %545, %552 : vector<1x128xf32>
    %cst_119 = arith.constant -0.333333343 : f32
    %554 = vector.broadcast %cst_119 : f32 to vector<1x128xf32>
    %555 = arith.addf %554, %553 : vector<1x128xf32>
    %556 = arith.mulf %545, %555 : vector<1x128xf32>
    %cst_120 = arith.constant 1.000000e+00 : f32
    %557 = vector.broadcast %cst_120 : f32 to vector<1x128xf32>
    %558 = arith.addf %557, %556 : vector<1x128xf32>
    %559 = arith.mulf %544, %558 : vector<1x128xf32>
    %cst_121 = arith.constant 4.000000e+00 : f32
    %560 = vector.broadcast %cst_121 : f32 to vector<1x128xf32>
    %561 = arith.mulf %560, %559 : vector<1x128xf32>
    %cst_122 = arith.constant 1.57079637 : f32
    %562 = vector.broadcast %cst_122 : f32 to vector<1x128xf32>
    %563 = arith.subf %562, %561 : vector<1x128xf32>
    %564 = arith.select %525, %563, %561 : vector<1x128xi1>, vector<1x128xf32>
    %cst_123 = arith.constant 0.000000e+00 : f32
    %565 = vector.broadcast %cst_123 : f32 to vector<1x128xf32>
    %566 = arith.cmpf olt, %522, %565 : vector<1x128xf32>
    %cst_124 = arith.constant 0.000000e+00 : f32
    %567 = vector.broadcast %cst_124 : f32 to vector<1x128xf32>
    %568 = arith.subf %567, %564 : vector<1x128xf32>
    %569 = arith.select %566, %568, %564 : vector<1x128xi1>, vector<1x128xf32>
    %cst_125 = arith.constant 2.000000e+00 : f32
    %570 = vector.broadcast %cst_125 : f32 to vector<1x128xf32>
    %571 = arith.mulf %570, %569 : vector<1x128xf32>
    %572 = arith.divf %571, %516 : vector<1x128xf32>
    %cst_126 = arith.constant 0.000000e+00 : f32
    %573 = vector.broadcast %cst_126 : f32 to vector<1x128xf32>
    %574 = arith.cmpf oge, %506, %573 : vector<1x128xf32>
    %cst_127 = arith.constant 1.000000e+00 : f32
    %cst_128 = arith.constant -1.000000e+00 : f32
    %575 = vector.broadcast %cst_127 : f32 to vector<1x128xf32>
    %576 = vector.broadcast %cst_128 : f32 to vector<1x128xf32>
    %577 = arith.select %574, %575, %576 : vector<1x128xi1>, vector<1x128xf32>
    %cst_129 = arith.constant 3.14159274 : f32
    %578 = vector.broadcast %cst_129 : f32 to vector<1x128xf32>
    %579 = arith.mulf %577, %578 : vector<1x128xf32>
    %580 = arith.divf %579, %516 : vector<1x128xf32>
    %cst_130 = arith.constant 2.000000e+00 : f32
    %581 = vector.broadcast %cst_130 : f32 to vector<1x128xf32>
    %582 = arith.divf %581, %521 : vector<1x128xf32>
    %cst_131 = arith.constant 0.666666686 : f32
    %583 = vector.broadcast %cst_131 : f32 to vector<1x128xf32>
    %584 = arith.mulf %583, %511 : vector<1x128xf32>
    %585 = arith.mulf %521, %521 : vector<1x128xf32>
    %586 = arith.mulf %585, %521 : vector<1x128xf32>
    %587 = arith.divf %584, %586 : vector<1x128xf32>
    %588 = arith.subf %582, %587 : vector<1x128xf32>
    %cst_132 = arith.constant 9.99999997E-7 : f32
    %589 = vector.broadcast %cst_132 : f32 to vector<1x128xf32>
    %590 = arith.cmpf ogt, %512, %589 : vector<1x128xf32>
    %591 = math.absf %506 : vector<1x128xf32>
    %cst_133 = arith.constant 9.99999997E-7 : f32
    %592 = vector.broadcast %cst_133 : f32 to vector<1x128xf32>
    %593 = arith.cmpf ogt, %591, %592 : vector<1x128xf32>
    %594 = arith.select %593, %572, %580 : vector<1x128xi1>, vector<1x128xf32>
    %595 = arith.select %590, %594, %588 : vector<1x128xi1>, vector<1x128xf32>
    %596 = arith.mulf %595, %485 : vector<1x128xf32>
    %597 = arith.mulf %595, %492 : vector<1x128xf32>
    %598 = arith.mulf %595, %499 : vector<1x128xf32>
    %599 = tpu.concatenate %434, %436, %438, %596, %597, %598, %0, %0 in 0 : vector<1x128xf32>, vector<1x128xf32>, vector<1x128xf32>, vector<1x128xf32>, vector<1x128xf32>, vector<1x128xf32>, vector<1x128xf32>, vector<1x128xf32> -> vector<8x128xf32>
    %c8_134 = arith.constant 8 : index
    %c0_135 = arith.constant 0 : index
    %600 = vector.load %arg1[%c8_134, %c0_135] : memref<24x128xf32, #tpu.memory_space<vmem>>, vector<8x128xf32>
    tpu.vector_store %arg1[%c8_134, %c0_135], %599 {strides = array<i32>} : memref<24x128xf32, #tpu.memory_space<vmem>>, vector<8x128xf32>,
    %601 = arith.subf %412, %402 : vector<1x128xf32>
    %602 = arith.mulf %409, %432 : vector<1x128xf32>
    %603 = arith.addf %602, %429 : vector<1x128xf32>
    %604 = arith.subf %601, %603 : vector<1x128xf32>
    %605 = arith.subf %413, %403 : vector<1x128xf32>
    %606 = arith.mulf %410, %432 : vector<1x128xf32>
    %607 = arith.addf %606, %430 : vector<1x128xf32>
    %608 = arith.subf %605, %607 : vector<1x128xf32>
    %609 = arith.subf %414, %404 : vector<1x128xf32>
    %610 = arith.mulf %411, %432 : vector<1x128xf32>
    %611 = arith.addf %610, %431 : vector<1x128xf32>
    %612 = arith.subf %609, %611 : vector<1x128xf32>
    %613 = tpu.concatenate %604, %608, %612, %0, %0, %0, %0, %0 in 0 : vector<1x128xf32>, vector<1x128xf32>, vector<1x128xf32>, vector<1x128xf32>, vector<1x128xf32>, vector<1x128xf32>, vector<1x128xf32>, vector<1x128xf32> -> vector<8x128xf32>
    %c16_136 = arith.constant 16 : index
    %c0_137 = arith.constant 0 : index
    %614 = vector.load %arg1[%c16_136, %c0_137] : memref<24x128xf32, #tpu.memory_space<vmem>>, vector<8x128xf32>
    tpu.vector_store %arg1[%c16_136, %c0_137], %613 {strides = array<i32>} : memref<24x128xf32, #tpu.memory_space<vmem>>, vector<8x128xf32>,
    return
  }
}

</mosaic_0001>

<llo_original>
// kernel: pose_vel_graph_forward.1
$region0: #{pose_vel_graph_forward.1}
  #allocation0 [shape = 'u32[]', space=smem, size = 0x4, offset = 0x4, fixed_abs, tag = 'smem constant byte address 0x4 - core index']
  #allocation1 [shape = 'u32[72,128]{1,0:T(1,128)}', space=vmem, size = 0x9000, scoped, tag = 'internal scratch']
  %s0 = inlined_call_operand.vmem [shape: f32[64,128], index: 0, kind: input, shape index: {}]
  %s1 = inlined_call_operand.vmem [shape: f32[24,128], index: 1, kind: output, shape index: {}]
  %s2 = sld [smem:[#allocation0]]
  $region14: #{pose_vel_graph_forward.1} parent=0
    _
  %s4 = ssub.s32 1, %s2
  %s5 = scalar_select 0, %s4, %s2
  // Predicated region
  $region2: #{pose_vel_graph_forward.1} parent=0 // pred_check
    _
  $region3: #{pose_vel_graph_forward.1} parent=0 // pred_check_branch
    %7 = sbr.rel (0) target = $region5
  $region4: #{pose_vel_graph_forward.1} parent=0 // pred_region
    _
  $region5: #{pose_vel_graph_forward.1} parent=0 // pred_fallthru
    _
  %v8 = vld [vmem:[%s0] sm:$0x1]
  %v9 = vld [vmem:[%s0 + $0x1] sm:$0x1]
  %v10 = vld [vmem:[%s0 + $0x2] sm:$0x1]
  %v11 = vld [vmem:[%s0 + $0x3] sm:$0x1]
  %v12 = vld [vmem:[%s0 + $0x4] sm:$0x1]
  %v13 = vld [vmem:[%s0 + $0x5] sm:$0x1]
  %v14 = vld [vmem:[%s0 + $0x6] sm:$0x1]
  %v15 = vld [vmem:[%s0 + $0x8] sm:$0x1]
  %v16 = vld [vmem:[%s0 + $0x9] sm:$0x1]
  %v17 = vld [vmem:[%s0 + $0xa] sm:$0x1]
  %v18 = vld [vmem:[%s0 + $0xb] sm:$0x1]
  %v19 = vld [vmem:[%s0 + $0xc] sm:$0x1]
  %v20 = vld [vmem:[%s0 + $0xd] sm:$0x1]
  %v21 = vld [vmem:[%s0 + $0xe] sm:$0x1]
  %v22 = vld [vmem:[%s0 + $0x10] sm:$0x1]
  %v23 = vld [vmem:[%s0 + $0x11] sm:$0x1]
  %v24 = vld [vmem:[%s0 + $0x12] sm:$0x1]
  %v25 = vld [vmem:[%s0 + $0x13] sm:$0x1]
  %v26 = vld [vmem:[%s0 + $0x14] sm:$0x1]
  %v27 = vld [vmem:[%s0 + $0x15] sm:$0x1]
  %v28 = vld [vmem:[%s0 + $0x16] sm:$0x1]
  %v29 = vsub.f32 0.0, %v11
  %v30 = vsub.f32 0.0, %v12
  %v31 = vsub.f32 0.0, %v13
  %v32 = vmul.f32 %v30, %v10
  %v33 = vmul.f32 %v31, %v9
  %v34 = vsub.f32 %v32, %v33
  %v35 = vmul.f32 %v34, 2.0
  %v36 = vmul.f32 %v31, %v8
  %v37 = vmul.f32 %v29, %v10
  %v38 = vsub.f32 %v36, %v37
  %v39 = vmul.f32 %v38, 2.0
  %v40 = vmul.f32 %v29, %v9
  %v41 = vmul.f32 %v30, %v8
  %v42 = vsub.f32 %v40, %v41
  %v43 = vmul.f32 %v42, 2.0
  %v44 = vmul.f32 %v14, %v35
  %v45 = vadd.f32 %v8, %v44
  %v46 = vmul.f32 %v30, %v43
  %v47 = vmul.f32 %v31, %v39
  %v48 = vsub.f32 %v46, %v47
  %v49 = vadd.f32 %v45, %v48
  %v50 = vmul.f32 %v14, %v39
  %v51 = vadd.f32 %v9, %v50
  %v52 = vmul.f32 %v31, %v35
  %v53 = vmul.f32 %v29, %v43
  %v54 = vsub.f32 %v52, %v53
  %v55 = vadd.f32 %v51, %v54
  %v56 = vmul.f32 %v14, %v43
  %v57 = vadd.f32 %v10, %v56
  %v58 = vmul.f32 %v29, %v39
  %v59 = vmul.f32 %v30, %v35
  %v60 = vsub.f32 %v58, %v59
  %v61 = vadd.f32 %v57, %v60
  %v62 = vsub.f32 0.0, %v49
  %v63 = vsub.f32 0.0, %v55
  %v64 = vsub.f32 0.0, %v61
  %v65 = vsub.f32 0.0, %v18
  %v66 = vsub.f32 0.0, %v19
  %v67 = vsub.f32 0.0, %v20
  %v68 = vmul.f32 %v66, %v17
  %v69 = vmul.f32 %v67, %v16
  %v70 = vsub.f32 %v68, %v69
  %v71 = vmul.f32 %v70, 2.0
  %v72 = vmul.f32 %v67, %v15
  %v73 = vmul.f32 %v65, %v17
  %v74 = vsub.f32 %v72, %v73
  %v75 = vmul.f32 %v74, 2.0
  %v76 = vmul.f32 %v65, %v16
  %v77 = vmul.f32 %v66, %v15
  %v78 = vsub.f32 %v76, %v77
  %v79 = vmul.f32 %v78, 2.0
  %v80 = vmul.f32 %v21, %v71
  %v81 = vadd.f32 %v15, %v80
  %v82 = vmul.f32 %v66, %v79
  %v83 = vmul.f32 %v67, %v75
  %v84 = vsub.f32 %v82, %v83
  %v85 = vadd.f32 %v81, %v84
  %v86 = vmul.f32 %v21, %v75
  %v87 = vadd.f32 %v16, %v86
  %v88 = vmul.f32 %v67, %v71
  %v89 = vmul.f32 %v65, %v79
  %v90 = vsub.f32 %v88, %v89
  %v91 = vadd.f32 %v87, %v90
  %v92 = vmul.f32 %v21, %v79
  %v93 = vadd.f32 %v17, %v92
  %v94 = vmul.f32 %v65, %v75
  %v95 = vmul.f32 %v66, %v71
  %v96 = vsub.f32 %v94, %v95
  %v97 = vadd.f32 %v93, %v96
  %v98 = vsub.f32 0.0, %v85
  %v99 = vsub.f32 0.0, %v91
  %v100 = vsub.f32 0.0, %v97
  %v101 = vmul.f32 %v30, %v100
  %v102 = vmul.f32 %v31, %v99
  %v103 = vsub.f32 %v101, %v102
  %v104 = vmul.f32 %v103, 2.0
  %v105 = vmul.f32 %v31, %v98
  %v106 = vmul.f32 %v29, %v100
  %v107 = vsub.f32 %v105, %v106
  %v108 = vmul.f32 %v107, 2.0
  %v109 = vmul.f32 %v29, %v99
  %v110 = vmul.f32 %v30, %v98
  %v111 = vsub.f32 %v109, %v110
  %v112 = vmul.f32 %v111, 2.0
  %v113 = vmul.f32 %v14, %v104
  %v114 = vadd.f32 %v98, %v113
  %v115 = vmul.f32 %v30, %v112
  %v116 = vmul.f32 %v31, %v108
  %v117 = vsub.f32 %v115, %v116
  %v118 = vadd.f32 %v114, %v117
  %v119 = vmul.f32 %v14, %v108
  %v120 = vadd.f32 %v99, %v119
  %v121 = vmul.f32 %v31, %v104
  %v122 = vmul.f32 %v29, %v112
  %v123 = vsub.f32 %v121, %v122
  %v124 = vadd.f32 %v120, %v123
  %v125 = vmul.f32 %v14, %v112
  %v126 = vadd.f32 %v100, %v125
  %v127 = vmul.f32 %v29, %v108
  %v128 = vmul.f32 %v30, %v104
  %v129 = vsub.f32 %v127, %v128
  %v130 = vadd.f32 %v126, %v129
  %v131 = vadd.f32 %v62, %v118
  %v132 = vadd.f32 %v63, %v124
  %v133 = vadd.f32 %v64, %v130
  %v134 = vmul.f32 %v14, %v65
  %v135 = vmul.f32 %v29, %v21
  %v136 = vadd.f32 %v134, %v135
  %v137 = vmul.f32 %v30, %v67
  %v138 = vadd.f32 %v136, %v137
  %v139 = vmul.f32 %v31, %v66
  %v140 = vsub.f32 %v138, %v139
  %v141 = vmul.f32 %v14, %v66
  %v142 = vmul.f32 %v29, %v67
  %v143 = vsub.f32 %v141, %v142
  %v144 = vmul.f32 %v30, %v21
  %v145 = vadd.f32 %v143, %v144
  %v146 = vmul.f32 %v31, %v65
  %v147 = vadd.f32 %v145, %v146
  %v148 = vmul.f32 %v14, %v67
  %v149 = vmul.f32 %v29, %v66
  %v150 = vadd.f32 %v148, %v149
  %v151 = vmul.f32 %v30, %v65
  %v152 = vsub.f32 %v150, %v151
  %v153 = vmul.f32 %v31, %v21
  %v154 = vadd.f32 %v152, %v153
  %v155 = vmul.f32 %v14, %v21
  %v156 = vmul.f32 %v29, %v65
  %v157 = vsub.f32 %v155, %v156
  %v158 = vmul.f32 %v30, %v66
  %v159 = vsub.f32 %v157, %v158
  %v160 = vmul.f32 %v31, %v67
  %v161 = vsub.f32 %v159, %v160
  %v162 = vmul.f32 %v147, %v24
  %v163 = vmul.f32 %v154, %v23
  %v164 = vsub.f32 %v162, %v163
  %v165 = vmul.f32 %v164, 2.0
  %v166 = vmul.f32 %v154, %v22
  %v167 = vmul.f32 %v140, %v24
  %v168 = vsub.f32 %v166, %v167
  %v169 = vmul.f32 %v168, 2.0
  %v170 = vmul.f32 %v140, %v23
  %v171 = vmul.f32 %v147, %v22
  %v172 = vsub.f32 %v170, %v171
  %v173 = vmul.f32 %v172, 2.0
  %v174 = vmul.f32 %v161, %v165
  %v175 = vadd.f32 %v22, %v174
  %v176 = vmul.f32 %v147, %v173
  %v177 = vmul.f32 %v154, %v169
  %v178 = vsub.f32 %v176, %v177
  %v179 = vadd.f32 %v175, %v178
  %v180 = vmul.f32 %v161, %v169
  %v181 = vadd.f32 %v23, %v180
  %v182 = vmul.f32 %v154, %v165
  %v183 = vmul.f32 %v140, %v173
  %v184 = vsub.f32 %v182, %v183
  %v185 = vadd.f32 %v181, %v184
  %v186 = vmul.f32 %v161, %v173
  %v187 = vadd.f32 %v24, %v186
  %v188 = vmul.f32 %v140, %v169
  %v189 = vmul.f32 %v147, %v165
  %v190 = vsub.f32 %v188, %v189
  %v191 = vadd.f32 %v187, %v190
  %v192 = vadd.f32 %v131, %v179
  %v193 = vadd.f32 %v132, %v185
  %v194 = vadd.f32 %v133, %v191
  %v195 = vmul.f32 %v161, %v25
  %v196 = vmul.f32 %v140, %v28
  %v197 = vadd.f32 %v195, %v196
  %v198 = vmul.f32 %v147, %v27
  %v199 = vadd.f32 %v197, %v198
  %v200 = vmul.f32 %v154, %v26
  %v201 = vsub.f32 %v199, %v200
  %v202 = vmul.f32 %v161, %v26
  %v203 = vmul.f32 %v140, %v27
  %v204 = vsub.f32 %v202, %v203
  %v205 = vmul.f32 %v147, %v28
  %v206 = vadd.f32 %v204, %v205
  %v207 = vmul.f32 %v154, %v25
  %v208 = vadd.f32 %v206, %v207
  %v209 = vmul.f32 %v161, %v27
  %v210 = vmul.f32 %v140, %v26
  %v211 = vadd.f32 %v209, %v210
  %v212 = vmul.f32 %v147, %v25
  %v213 = vsub.f32 %v211, %v212
  %v214 = vmul.f32 %v154, %v28
  %v215 = vadd.f32 %v213, %v214
  %v216 = vmul.f32 %v161, %v28
  %v217 = vmul.f32 %v140, %v25
  %v218 = vsub.f32 %v216, %v217
  %v219 = vmul.f32 %v147, %v26
  %v220 = vsub.f32 %v218, %v219
  %v221 = vmul.f32 %v154, %v27
  %v222 = vsub.f32 %v220, %v221
  %v223 = vmul.f32 %v201, %v201
  %v224 = vmul.f32 %v208, %v208
  %v225 = vadd.f32 %v223, %v224
  %v226 = vmul.f32 %v215, %v215
  %v227 = vadd.f32 %v225, %v226
  %v228 = vrsqrt.pop %v227
  %v229 = vmul.f32 %v228, %v227
  %v230 = vmul.f32 %v229, %v228
  %v231 = vmul.f32 0.5, %v230
  %v232 = vsub.f32 1.5, %v231
  %v233 = vmul.f32 %v228, %v232
  %v234 = vmul.f32 %v227, %v233
  %vm235 = vcmp.eq.f32.partialorder %v227, inf
  %v236 = vsel %vm235, %v227, %v234
  %vm237 = vcmp.eq.f32.partialorder %v227, 0.0
  %v238 = vand.u32 %v227, 2147483648
  %v239 = vsel %vm237, %v238, %v236
  %vm240 = vcmp.gt.f32.partialorder %v239, 1e-06
  %v241 = vsel %vm240, %v239, 1.0
  %v242 = vand.u32 2147483647, %v222
  %vm243 = vcmp.gt.f32.partialorder %v242, 1e-06
  %v244 = vsel %vm243, %v222, 1.0
  %v245 = vrcp.pop %v244
  %v246 = vmul.f32 %v244, %v245
  %v247 = vsub.f32 1.0, %v246
  %v248 = vmul.f32 %v245, %v247
  %v249 = vadd.f32 %v245, %v248
  %vm250 = vweird.f32 %v244
  %vm251 = vweird.f32 %v245
  %vm252 = vmor %vm250, %vm251
  %v253 = vsel %vm252, %v245, %v249
  %v254 = vand.u32 2147483647, %v244
  %vm255 = vcmp.eq.f32.partialorder %v254, 8.507059e+37
  %v256 = vand.u32 %v244, 2147483648
  %v257 = vor.u32 1.1754944e-38, %v256
  %v258 = vsel %vm255, %v257, %v253
  %v259 = vmul.f32 %v239, %v258
  %v260 = vand.u32 2147483647, %v259
  %vm261 = vcmp.gt.f32.partialorder %v260, 1.0
  %v262 = vmax.f32 %v260, 1.0
  %v263 = vrcp.pop %v262
  %v264 = vmul.f32 %v262, %v263
  %v265 = vsub.f32 1.0, %v264
  %v266 = vmul.f32 %v263, %v265
  %v267 = vadd.f32 %v263, %v266
  %vm268 = vweird.f32 %v262
  %vm269 = vweird.f32 %v263
  %vm270 = vmor %vm268, %vm269
  %v271 = vsel %vm270, %v263, %v267
  %v272 = vand.u32 2147483647, %v262
  %vm273 = vcmp.eq.f32.partialorder %v272, 8.507059e+37
  %v274 = vand.u32 %v262, 2147483648
  %v275 = vor.u32 1.1754944e-38, %v274
  %v276 = vsel %vm273, %v275, %v271
  %v277 = vmul.f32 1.0, %v276
  %v278 = vsel %vm261, %v277, %v260
  %v279 = vmul.f32 %v278, %v278
  %v280 = vadd.f32 %v279, 1.0
  %v281 = vrsqrt.pop %v280
  %v282 = vmul.f32 %v281, %v280
  %v283 = vmul.f32 %v282, %v281
  %v284 = vmul.f32 0.5, %v283
  %v285 = vsub.f32 1.5, %v284
  %v286 = vmul.f32 %v281, %v285
  %v287 = vmul.f32 %v280, %v286
  %vm288 = vcmp.eq.f32.partialorder %v280, inf
  %v289 = vsel %vm288, %v280, %v287
  %vm290 = vcmp.eq.f32.partialorder %v280, 0.0
  %v291 = vand.u32 %v280, 2147483648
  %v292 = vsel %vm290, %v291, %v289
  %v293 = vadd.f32 %v292, 1.0
  %v294 = vrcp.pop %v293
  %v295 = vmul.f32 %v293, %v294
  %v296 = vsub.f32 1.0, %v295
  %v297 = vmul.f32 %v294, %v296
  %v298 = vadd.f32 %v294, %v297
  %vm299 = vweird.f32 %v293
  %vm300 = vweird.f32 %v294
  %vm301 = vmor %vm299, %vm300
  %v302 = vsel %vm301, %v294, %v298
  %v303 = vand.u32 2147483647, %v293
  %vm304 = vcmp.eq.f32.partialorder %v303, 8.507059e+37
  %v305 = vand.u32 %v293, 2147483648
  %v306 = vor.u32 1.1754944e-38, %v305
  %v307 = vsel %vm304, %v306, %v302
  %v308 = vmul.f32 %v278, %v307
  %v309 = vmul.f32 %v308, %v308
  %v310 = vadd.f32 %v309, 1.0
  %v311 = vrsqrt.pop %v310
  %v312 = vmul.f32 %v311, %v310
  %v313 = vmul.f32 %v312, %v311
  %v314 = vmul.f32 0.5, %v313
  %v315 = vsub.f32 1.5, %v314
  %v316 = vmul.f32 %v311, %v315
  %v317 = vmul.f32 %v310, %v316
  %vm318 = vcmp.eq.f32.partialorder %v310, inf
  %v319 = vsel %vm318, %v310, %v317
  %vm320 = vcmp.eq.f32.partialorder %v310, 0.0
  %v321 = vand.u32 %v310, 2147483648
  %v322 = vsel %vm320, %v321, %v319
  %v323 = vadd.f32 %v322, 1.0
  %v324 = vrcp.pop %v323
  %v325 = vmul.f32 %v323, %v324
  %v326 = vsub.f32 1.0, %v325
  %v327 = vmul.f32 %v324, %v326
  %v328 = vadd.f32 %v324, %v327
  %vm329 = vweird.f32 %v323
  %vm330 = vweird.f32 %v324
  %vm331 = vmor %vm329, %vm330
  %v332 = vsel %vm331, %v324, %v328
  %v333 = vand.u32 2147483647, %v323
  %vm334 = vcmp.eq.f32.partialorder %v333, 8.507059e+37
  %v335 = vand.u32 %v323, 2147483648
  %v336 = vor.u32 1.1754944e-38, %v335
  %v337 = vsel %vm334, %v336, %v332
  %v338 = vmul.f32 %v308, %v337
  %v339 = vmul.f32 %v338, %v338
  %v340 = vmul.f32 %v339, 0.11111111
  %v341 = vadd.f32 %v340, -0.14285715
  %v342 = vmul.f32 %v339, %v341
  %v343 = vadd.f32 %v342, 0.2
  %v344 = vmul.f32 %v339, %v343
  %v345 = vadd.f32 %v344, -0.33333334
  %v346 = vmul.f32 %v339, %v345
  %v347 = vadd.f32 %v346, 1.0
  %v348 = vmul.f32 %v338, %v347
  %v349 = vmul.f32 %v348, 4.0
  %v350 = vsub.f32 1.5707964, %v349
  %v351 = vsel %vm261, %v350, %v349
  %vm352 = vcmp.lt.f32.partialorder %v259, 0.0
  %v353 = vsub.f32 0.0, %v351
  %v354 = vsel %vm352, %v353, %v351
  %v355 = vmul.f32 %v354, 2.0
  %v356 = vrcp.pop %v241
  %v357 = vmul.f32 %v241, %v356
  %v358 = vsub.f32 1.0, %v357
  %v359 = vmul.f32 %v356, %v358
  %v360 = vadd.f32 %v356, %v359
  %vm361 = vweird.f32 %v241
  %vm362 = vweird.f32 %v356
  %vm363 = vmor %vm361, %vm362
  %v364 = vsel %vm363, %v356, %v360
  %v365 = vand.u32 2147483647, %v241
  %vm366 = vcmp.eq.f32.partialorder %v365, 8.507059e+37
  %v367 = vand.u32 %v241, 2147483648
  %v368 = vor.u32 1.1754944e-38, %v367
  %v369 = vsel %vm366, %v368, %v364
  %v370 = vmul.f32 %v355, %v369
  %vm371 = vcmp.ge.f32.partialorder %v222, 0.0
  %v372 = vsel %vm371, 1.0, -1.0
  %v373 = vmul.f32 %v372, 3.1415927
  %v374 = vmul.f32 %v373, %v369
  %v375 = vmul.f32 2.0, %v258
  %v376 = vmul.f32 %v227, 0.6666667
  %v377 = vmul.f32 %v244, %v244
  %v378 = vmul.f32 %v377, %v244
  %v379 = vrcp.pop %v378
  %v380 = vmul.f32 %v378, %v379
  %v381 = vsub.f32 1.0, %v380
  %v382 = vmul.f32 %v379, %v381
  %v383 = vadd.f32 %v379, %v382
  %vm384 = vweird.f32 %v378
  %vm385 = vweird.f32 %v379
  %vm386 = vmor %vm384, %vm385
  %v387 = vsel %vm386, %v379, %v383
  %v388 = vand.u32 2147483647, %v378
  %vm389 = vcmp.eq.f32.partialorder %v388, 8.507059e+37
  %v390 = vand.u32 %v378, 2147483648
  %v391 = vor.u32 1.1754944e-38, %v390
  %v392 = vsel %vm389, %v391, %v387
  %v393 = vmul.f32 %v376, %v392
  %v394 = vsub.f32 %v375, %v393
  %v395 = vsel %vm243, %v370, %v374
  %v396 = vsel %vm240, %v395, %v394
  %v397 = vmul.f32 %v396, %v201
  %v398 = vmul.f32 %v396, %v208
  %v399 = vmul.f32 %v396, %v215
  %v400 = vmul.f32 %v397, %v397
  %v401 = vmul.f32 %v398, %v398
  %v402 = vadd.f32 %v400, %v401
  %v403 = vmul.f32 %v399, %v399
  %v404 = vadd.f32 %v402, %v403
  %v405 = vrsqrt.pop %v404
  %v406 = vmul.f32 %v405, %v404
  %v407 = vmul.f32 %v406, %v405
  %v408 = vmul.f32 0.5, %v407
  %v409 = vsub.f32 1.5, %v408
  %v410 = vmul.f32 %v405, %v409
  %v411 = vmul.f32 %v404, %v410
  %vm412 = vcmp.eq.f32.partialorder %v404, inf
  %v413 = vsel %vm412, %v404, %v411
  %vm414 = vcmp.eq.f32.partialorder %v404, 0.0
  %v415 = vand.u32 %v404, 2147483648
  %v416 = vsel %vm414, %v415, %v413
  %v417 = vmul.f32 %v242, %v369
  %vm418 = vcmp.gt.f32.partialorder %v416, 1e-06
  %v419 = vsel %vm418, %v416, 1.0
  %v420 = vmul.f32 %v419, 0.5
  %v421 = vmul.f32 %v420, %v417
  %v422 = vsub.f32 1.0, %v421
  %v423 = vmul.f32 %v419, %v419
  %v424 = vrcp.pop %v423
  %v425 = vmul.f32 %v423, %v424
  %v426 = vsub.f32 1.0, %v425
  %v427 = vmul.f32 %v424, %v426
  %v428 = vadd.f32 %v424, %v427
  %vm429 = vweird.f32 %v423
  %vm430 = vweird.f32 %v424
  %vm431 = vmor %vm429, %vm430
  %v432 = vsel %vm431, %v424, %v428
  %v433 = vand.u32 2147483647, %v423
  %vm434 = vcmp.eq.f32.partialorder %v433, 8.507059e+37
  %v435 = vand.u32 %v423, 2147483648
  %v436 = vor.u32 1.1754944e-38, %v435
  %v437 = vsel %vm434, %v436, %v432
  %v438 = vmul.f32 %v422, %v437
  %v439 = vsel %vm418, %v438, 0.083333336
  %v440 = vmul.f32 %v398, %v194
  %v441 = vmul.f32 %v399, %v193
  %v442 = vsub.f32 %v440, %v441
  %v443 = vmul.f32 %v399, %v192
  %v444 = vmul.f32 %v397, %v194
  %v445 = vsub.f32 %v443, %v444
  %v446 = vmul.f32 %v397, %v193
  %v447 = vmul.f32 %v398, %v192
  %v448 = vsub.f32 %v446, %v447
  %v449 = vmul.f32 %v398, %v448
  %v450 = vmul.f32 %v399, %v445
  %v451 = vsub.f32 %v449, %v450
  %v452 = vmul.f32 %v399, %v442
  %v453 = vmul.f32 %v397, %v448
  %v454 = vsub.f32 %v452, %v453
  %v455 = vmul.f32 %v397, %v445
  %v456 = vmul.f32 %v398, %v442
  %v457 = vsub.f32 %v455, %v456
  %v458 = vmul.f32 %v442, 0.5
  %v459 = vsub.f32 %v192, %v458
  %v460 = vmul.f32 %v439, %v451
  %v461 = vadd.f32 %v459, %v460
  %v462 = vmul.f32 %v445, 0.5
  %v463 = vsub.f32 %v193, %v462
  %v464 = vmul.f32 %v439, %v454
  %v465 = vadd.f32 %v463, %v464
  %v466 = vmul.f32 %v448, 0.5
  %v467 = vsub.f32 %v194, %v466
  %v468 = vmul.f32 %v439, %v457
  %v469 = vadd.f32 %v467, %v468
  %v471 = vrot.slane %v465, 7
  %v474 = vrot.slane %v469, 6
  %v477 = vrot.slane %v397, 5
  %v480 = vrot.slane %v398, 4
  %v483 = vrot.slane %v399, 3
  %vm485 = vcmask 1040384
  %v486 = vsel %vm485, %v461, %v471
  %vm487 = vcmask 1041408
  %v488 = vsel %vm487, %v486, %v474
  %vm489 = vcmask 1042432
  %v490 = vsel %vm489, %v488, %v477
  %vm491 = vcmask 1043456
  %v492 = vsel %vm491, %v490, %v480
  %vm493 = vcmask 1044480
  %v494 = vsel %vm493, %v492, %v483
  %vm495 = vcmask 1045504
  %v496 = vsel %vm495, %v494, 0.0
  %vm497 = vcmask 1046528
  %v498 = vsel %vm497, %v496, 0.0
  %499 = vst [vmem:[%s1] sm:$0xff] %v498
  %v500 = vld [vmem:[%s0 + $0x18] sm:$0xff]
  %v501 = vld [vmem:[%s0 + $0x20] sm:$0xff]
  %502 = vrot.lane.b32.xlu0 %v500, 127
  %v503 = vpop.permute.xlu0 %502
  %504 = vrot.lane.b32.xlu0 %v501, 127
  %v505 = vpop.permute.xlu0 %504
  %v506 = vld [vmem:[%s0 + $0x28] sm:$0x1]
  %v507 = vld [vmem:[%s0 + $0x29] sm:$0x1]
  %v508 = vld [vmem:[%s0 + $0x2a] sm:$0x1]
  %v509 = vld [vmem:[%s0 + $0x2b] sm:$0x1]
  %v510 = vld [vmem:[%s0 + $0x30] sm:$0x1]
  %v511 = vld [vmem:[%s0 + $0x31] sm:$0x1]
  %v512 = vld [vmem:[%s0 + $0x32] sm:$0x1]
  %v513 = vld [vmem:[%s0 + $0x38] sm:$0x1]
  %v514 = vld [vmem:[%s0 + $0x39] sm:$0x1]
  %v515 = vld [vmem:[%s0 + $0x3a] sm:$0x1]
  %v516 = vld [vmem:[%s0 + $0x3b] sm:$0x1]
  %v517 = vsub.f32 %v505, %v501
  %v518 = vsub.f32 %v510, %v517
  %v520 = vrot.slane %v517, 1
  %v522 = vsub.f32 %v511, %v520
  %v523 = vrot.slane %v517, 2
  %v525 = vsub.f32 %v512, %v523
  %v526 = vsub.f32 0.0, %v506
  %v527 = vsub.f32 0.0, %v507
  %v528 = vsub.f32 0.0, %v508
  %v529 = vsub.f32 0.0, %v500
  %v531 = vrot.slane %v529, 3
  %v533 = vmul.f32 %v509, %v531
  %v535 = vrot.slane %v500, 6
  %v537 = vmul.f32 %v526, %v535
  %v538 = vadd.f32 %v533, %v537
  %v539 = vrot.slane %v529, 5
  %v541 = vmul.f32 %v527, %v539
  %v542 = vadd.f32 %v538, %v541
  %v543 = vrot.slane %v529, 4
  %v545 = vmul.f32 %v528, %v543
  %v546 = vsub.f32 %v542, %v545
  %v547 = vmul.f32 %v509, %v543
  %v548 = vmul.f32 %v526, %v539
  %v549 = vsub.f32 %v547, %v548
  %v550 = vmul.f32 %v527, %v535
  %v551 = vadd.f32 %v549, %v550
  %v552 = vmul.f32 %v528, %v531
  %v553 = vadd.f32 %v551, %v552
  %v554 = vmul.f32 %v509, %v539
  %v555 = vmul.f32 %v526, %v543
  %v556 = vadd.f32 %v554, %v555
  %v557 = vmul.f32 %v527, %v531
  %v558 = vsub.f32 %v556, %v557
  %v559 = vmul.f32 %v528, %v535
  %v560 = vadd.f32 %v558, %v559
  %v561 = vmul.f32 %v509, %v535
  %v562 = vmul.f32 %v526, %v531
  %v563 = vsub.f32 %v561, %v562
  %v564 = vmul.f32 %v527, %v543
  %v565 = vsub.f32 %v563, %v564
  %v566 = vmul.f32 %v528, %v539
  %v567 = vsub.f32 %v565, %v566
  %v569 = vrot.slane %v503, 3
  %v571 = vmul.f32 %v567, %v569
  %v572 = vrot.slane %v503, 6
  %v574 = vmul.f32 %v546, %v572
  %v575 = vadd.f32 %v571, %v574
  %v576 = vrot.slane %v503, 5
  %v578 = vmul.f32 %v553, %v576
  %v579 = vadd.f32 %v575, %v578
  %v580 = vrot.slane %v503, 4
  %v582 = vmul.f32 %v560, %v580
  %v583 = vsub.f32 %v579, %v582
  %v584 = vmul.f32 %v567, %v580
  %v585 = vmul.f32 %v546, %v576
  %v586 = vsub.f32 %v584, %v585
  %v587 = vmul.f32 %v553, %v572
  %v588 = vadd.f32 %v586, %v587
  %v589 = vmul.f32 %v560, %v569
  %v590 = vadd.f32 %v588, %v589
  %v591 = vmul.f32 %v567, %v576
  %v592 = vmul.f32 %v546, %v580
  %v593 = vadd.f32 %v591, %v592
  %v594 = vmul.f32 %v553, %v569
  %v595 = vsub.f32 %v593, %v594
  %v596 = vmul.f32 %v560, %v572
  %v597 = vadd.f32 %v595, %v596
  %v598 = vmul.f32 %v567, %v572
  %v599 = vmul.f32 %v546, %v569
  %v600 = vsub.f32 %v598, %v599
  %v601 = vmul.f32 %v553, %v580
  %v602 = vsub.f32 %v600, %v601
  %v603 = vmul.f32 %v560, %v576
  %v604 = vsub.f32 %v602, %v603
  %v605 = vmul.f32 %v583, %v583
  %v606 = vmul.f32 %v590, %v590
  %v607 = vadd.f32 %v605, %v606
  %v608 = vmul.f32 %v597, %v597
  %v609 = vadd.f32 %v607, %v608
  %v610 = vrsqrt.pop %v609
  %v611 = vmul.f32 %v610, %v609
  %v612 = vmul.f32 %v611, %v610
  %v613 = vmul.f32 0.5, %v612
  %v614 = vsub.f32 1.5, %v613
  %v615 = vmul.f32 %v610, %v614
  %v616 = vmul.f32 %v609, %v615
  %vm617 = vcmp.eq.f32.partialorder %v609, inf
  %v618 = vsel %vm617, %v609, %v616
  %vm619 = vcmp.eq.f32.partialorder %v609, 0.0
  %v620 = vand.u32 %v609, 2147483648
  %v621 = vsel %vm619, %v620, %v618
  %vm622 = vcmp.gt.f32.partialorder %v621, 1e-06
  %v623 = vsel %vm622, %v621, 1.0
  %v624 = vand.u32 2147483647, %v604
  %vm625 = vcmp.gt.f32.partialorder %v624, 1e-06
  %v626 = vsel %vm625, %v604, 1.0
  %v627 = vrcp.pop %v626
  %v628 = vmul.f32 %v626, %v627
  %v629 = vsub.f32 1.0, %v628
  %v630 = vmul.f32 %v627, %v629
  %v631 = vadd.f32 %v627, %v630
  %vm632 = vweird.f32 %v626
  %vm633 = vweird.f32 %v627
  %vm634 = vmor %vm632, %vm633
  %v635 = vsel %vm634, %v627, %v631
  %v636 = vand.u32 2147483647, %v626
  %vm637 = vcmp.eq.f32.partialorder %v636, 8.507059e+37
  %v638 = vand.u32 %v626, 2147483648
  %v639 = vor.u32 1.1754944e-38, %v638
  %v640 = vsel %vm637, %v639, %v635
  %v641 = vmul.f32 %v621, %v640
  %v642 = vand.u32 2147483647, %v641
  %vm643 = vcmp.gt.f32.partialorder %v642, 1.0
  %v644 = vmax.f32 %v642, 1.0
  %v645 = vrcp.pop %v644
  %v646 = vmul.f32 %v644, %v645
  %v647 = vsub.f32 1.0, %v646
  %v648 = vmul.f32 %v645, %v647
  %v649 = vadd.f32 %v645, %v648
  %vm650 = vweird.f32 %v644
  %vm651 = vweird.f32 %v645
  %vm652 = vmor %vm650, %vm651
  %v653 = vsel %vm652, %v645, %v649
  %v654 = vand.u32 2147483647, %v644
  %vm655 = vcmp.eq.f32.partialorder %v654, 8.507059e+37
  %v656 = vand.u32 %v644, 2147483648
  %v657 = vor.u32 1.1754944e-38, %v656
  %v658 = vsel %vm655, %v657, %v653
  %v659 = vmul.f32 1.0, %v658
  %v660 = vsel %vm643, %v659, %v642
  %v661 = vmul.f32 %v660, %v660
  %v662 = vadd.f32 %v661, 1.0
  %v663 = vrsqrt.pop %v662
  %v664 = vmul.f32 %v663, %v662
  %v665 = vmul.f32 %v664, %v663
  %v666 = vmul.f32 0.5, %v665
  %v667 = vsub.f32 1.5, %v666
  %v668 = vmul.f32 %v663, %v667
  %v669 = vmul.f32 %v662, %v668
  %vm670 = vcmp.eq.f32.partialorder %v662, inf
  %v671 = vsel %vm670, %v662, %v669
  %vm672 = vcmp.eq.f32.partialorder %v662, 0.0
  %v673 = vand.u32 %v662, 2147483648
  %v674 = vsel %vm672, %v673, %v671
  %v675 = vadd.f32 %v674, 1.0
  %v676 = vrcp.pop %v675
  %v677 = vmul.f32 %v675, %v676
  %v678 = vsub.f32 1.0, %v677
  %v679 = vmul.f32 %v676, %v678
  %v680 = vadd.f32 %v676, %v679
  %vm681 = vweird.f32 %v675
  %vm682 = vweird.f32 %v676
  %vm683 = vmor %vm681, %vm682
  %v684 = vsel %vm683, %v676, %v680
  %v685 = vand.u32 2147483647, %v675
  %vm686 = vcmp.eq.f32.partialorder %v685, 8.507059e+37
  %v687 = vand.u32 %v675, 2147483648
  %v688 = vor.u32 1.1754944e-38, %v687
  %v689 = vsel %vm686, %v688, %v684
  %v690 = vmul.f32 %v660, %v689
  %v691 = vmul.f32 %v690, %v690
  %v692 = vadd.f32 %v691, 1.0
  %v693 = vrsqrt.pop %v692
  %v694 = vmul.f32 %v693, %v692
  %v695 = vmul.f32 %v694, %v693
  %v696 = vmul.f32 0.5, %v695
  %v697 = vsub.f32 1.5, %v696
  %v698 = vmul.f32 %v693, %v697
  %v699 = vmul.f32 %v692, %v698
  %vm700 = vcmp.eq.f32.partialorder %v692, inf
  %v701 = vsel %vm700, %v692, %v699
  %vm702 = vcmp.eq.f32.partialorder %v692, 0.0
  %v703 = vand.u32 %v692, 2147483648
  %v704 = vsel %vm702, %v703, %v701
  %v705 = vadd.f32 %v704, 1.0
  %v706 = vrcp.pop %v705
  %v707 = vmul.f32 %v705, %v706
  %v708 = vsub.f32 1.0, %v707
  %v709 = vmul.f32 %v706, %v708
  %v710 = vadd.f32 %v706, %v709
  %vm711 = vweird.f32 %v705
  %vm712 = vweird.f32 %v706
  %vm713 = vmor %vm711, %vm712
  %v714 = vsel %vm713, %v706, %v710
  %v715 = vand.u32 2147483647, %v705
  %vm716 = vcmp.eq.f32.partialorder %v715, 8.507059e+37
  %v717 = vand.u32 %v705, 2147483648
  %v718 = vor.u32 1.1754944e-38, %v717
  %v719 = vsel %vm716, %v718, %v714
  %v720 = vmul.f32 %v690, %v719
  %v721 = vmul.f32 %v720, %v720
  %v722 = vmul.f32 %v721, 0.11111111
  %v723 = vadd.f32 %v722, -0.14285715
  %v724 = vmul.f32 %v721, %v723
  %v725 = vadd.f32 %v724, 0.2
  %v726 = vmul.f32 %v721, %v725
  %v727 = vadd.f32 %v726, -0.33333334
  %v728 = vmul.f32 %v721, %v727
  %v729 = vadd.f32 %v728, 1.0
  %v730 = vmul.f32 %v720, %v729
  %v731 = vmul.f32 %v730, 4.0
  %v732 = vsub.f32 1.5707964, %v731
  %v733 = vsel %vm643, %v732, %v731
  %vm734 = vcmp.lt.f32.partialorder %v641, 0.0
  %v735 = vsub.f32 0.0, %v733
  %v736 = vsel %vm734, %v735, %v733
  %v737 = vmul.f32 %v736, 2.0
  %v738 = vrcp.pop %v623
  %v739 = vmul.f32 %v623, %v738
  %v740 = vsub.f32 1.0, %v739
  %v741 = vmul.f32 %v738, %v740
  %v742 = vadd.f32 %v738, %v741
  %vm743 = vweird.f32 %v623
  %vm744 = vweird.f32 %v738
  %vm745 = vmor %vm743, %vm744
  %v746 = vsel %vm745, %v738, %v742
  %v747 = vand.u32 2147483647, %v623
  %vm748 = vcmp.eq.f32.partialorder %v747, 8.507059e+37
  %v749 = vand.u32 %v623, 2147483648
  %v750 = vor.u32 1.1754944e-38, %v749
  %v751 = vsel %vm748, %v750, %v746
  %v752 = vmul.f32 %v737, %v751
  %vm753 = vcmp.ge.f32.partialorder %v604, 0.0
  %v754 = vsel %vm753, 1.0, -1.0
  %v755 = vmul.f32 %v754, 3.1415927
  %v756 = vmul.f32 %v755, %v751
  %v757 = vmul.f32 2.0, %v640
  %v758 = vmul.f32 %v609, 0.6666667
  %v759 = vmul.f32 %v626, %v626
  %v760 = vmul.f32 %v759, %v626
  %v761 = vrcp.pop %v760
  %v762 = vmul.f32 %v760, %v761
  %v763 = vsub.f32 1.0, %v762
  %v764 = vmul.f32 %v761, %v763
  %v765 = vadd.f32 %v761, %v764
  %vm766 = vweird.f32 %v760
  %vm767 = vweird.f32 %v761
  %vm768 = vmor %vm766, %vm767
  %v769 = vsel %vm768, %v761, %v765
  %v770 = vand.u32 2147483647, %v760
  %vm771 = vcmp.eq.f32.partialorder %v770, 8.507059e+37
  %v772 = vand.u32 %v760, 2147483648
  %v773 = vor.u32 1.1754944e-38, %v772
  %v774 = vsel %vm771, %v773, %v769
  %v775 = vmul.f32 %v758, %v774
  %v776 = vsub.f32 %v757, %v775
  %v777 = vsel %vm625, %v752, %v756
  %v778 = vsel %vm622, %v777, %v776
  %v779 = vmul.f32 %v778, %v583
  %v780 = vmul.f32 %v778, %v590
  %v781 = vmul.f32 %v778, %v597
  %v783 = vrot.slane %v522, 7
  %v786 = vrot.slane %v525, 6
  %v789 = vrot.slane %v779, 5
  %v792 = vrot.slane %v780, 4
  %v795 = vrot.slane %v781, 3
  %v797 = vsel %vm485, %v518, %v783
  %v798 = vsel %vm487, %v797, %v786
  %v799 = vsel %vm489, %v798, %v789
  %v800 = vsel %vm491, %v799, %v792
  %v801 = vsel %vm493, %v800, %v795
  %v802 = vsel %vm495, %v801, 0.0
  %v803 = vsel %vm497, %v802, 0.0
  %804 = vst [vmem:[%s1 + $0x8] sm:$0xff] %v803
  %v805 = vsub.f32 %v503, %v500
  %v806 = vmul.f32 %v501, %v516
  %v807 = vadd.f32 %v806, %v513
  %v808 = vsub.f32 %v805, %v807
  %v810 = vrot.slane %v516, 7
  %v812 = vmul.f32 %v501, %v810
  %v814 = vrot.slane %v514, 7
  %v816 = vadd.f32 %v812, %v814
  %v817 = vsub.f32 %v805, %v816
  %v818 = vrot.slane %v516, 6
  %v820 = vmul.f32 %v501, %v818
  %v822 = vrot.slane %v515, 6
  %v824 = vadd.f32 %v820, %v822
  %v825 = vsub.f32 %v805, %v824
  %v826 = vsel %vm485, %v808, %v817
  %v827 = vsel %vm487, %v826, %v825
  %v828 = vsel %vm489, %v827, 0.0
  %v829 = vsel %vm491, %v828, 0.0
  %v830 = vsel %vm493, %v829, 0.0
  %v831 = vsel %vm495, %v830, 0.0
  %v832 = vsel %vm497, %v831, 0.0
  %833 = vst [vmem:[%s1 + $0x10] sm:$0xff] %v832
  // Predicated region
  $region6: #{pose_vel_graph_forward.1} parent=0 // pred_check
    _
  $region7: #{pose_vel_graph_forward.1} parent=0 // pred_check_branch
    %835 = sbr.rel (0) target = $region9
  $region8: #{pose_vel_graph_forward.1} parent=0 // pred_region
    _
  $region9: #{pose_vel_graph_forward.1} parent=0 // pred_fallthru
    _
  // Predicated region
  $region10: #{pose_vel_graph_forward.1} parent=0 // pred_check
    _
  $region11: #{pose_vel_graph_forward.1} parent=0 // pred_check_branch
    %837 = sbr.rel (0) target = $region13
  $region12: #{pose_vel_graph_forward.1} parent=0 // pred_region
    _
  $region13: #{pose_vel_graph_forward.1} parent=0 // pred_fallthru
    _

</llo_original>
